<compile_context>
chip_gen: v5e
topology: v5e:2x2
jax: 0.10.0
libtpu: 0.0.40
codegen_flags: <defaults>
</compile_context>

<pallas_src>
import functools
import types

import jax
import jax.numpy as jnp
from jax import lax
from jax.experimental import pallas as pl
from jax.experimental.pallas import tpu as pltpu

EPS = 1e-5
F32 = jnp.float32


# ----------------------------- parameter slab layout -------------------------

def _slab_offsets(*, V, C, K, n_dil):
    """Row offsets of every tensor inside the packed (rows, C) parameter slab."""
    n_layers = 2 * n_dil
    v_pad = ((V + 7) // 8) * 8
    emb = 0                                   # (v_pad, C)  emb @ pre_w (pad rows = 0)
    rbw = emb + v_pad                         # n_layers*K tiles of (C, C): (layer j, tap k)
    pn1 = rbw + n_layers * K * C              # (C, C)
    pn2 = pn1 + C                             # (C, C)  post_net2 conv, norm affine folded in
    vec = pn2 + C                             # (1, C) vectors; vector i lives at row vec+8*i
    n_vec = 1 + n_layers + 2 * n_dil + 2
    return types.SimpleNamespace(
        v_pad=v_pad, emb=emb, rbw=rbw, pn1=pn1, pn2=pn2, vec=vec,
        rows=vec + 8 * n_vec,
        i_pre_b=0,                            # prenet conv bias
        i_conv_b=1,                           # + j  : residual conv biases (folded)
        i_g1=1 + n_layers,                    # + bi : layer-1 FreqNorm gain of block bi
        i_beta1=1 + n_layers + n_dil,         # + bi : layer-1 FreqNorm shift of block bi
        i_pn1_b=1 + n_layers + 2 * n_dil,
        i_pn2_b=1 + n_layers + 2 * n_dil + 1,
    )


# ----------------------------- fused Pallas kernel --------------------------

def make_text_encoder_kernel(*, B, T, C, V, K, dilations):
    n_dil = len(dilations)
    M = B * T
    inv_m = 1.0 / float(M)
    L = _slab_offsets(V=V, C=C, K=K, n_dil=n_dil)
    for d in dilations:
        assert T > d * (K - 1), f"T={T} too short for dilation {d} (kernel {K})"

    def kernel(ids_ref, w_ref, o_ref):
        # ---- static parameter views (8-aligned slices of the resident slab) ----
        def wmat(off):                        # (C, C) weight tile
            return w_ref[off:off + C, :]

        def vec(i):                           # (1, C) bias/gain/shift vector
            r = L.vec + 8 * i
            return w_ref[r:r + 1, :]

        ones_row = jnp.ones((1, M), F32)      # MXU-side FreqNorm reductions

        def freqnorm_stats(x):
            # BatchNorm1d training-mode stats over (batch, time) per channel; one-pass
            # biased variance; both sums computed as MXU contractions (idle unit).
            s1 = jnp.dot(ones_row, x, preferred_element_type=F32)
            s2 = jnp.dot(ones_row, x * x, preferred_element_type=F32)
            mean = s1 * inv_m
            var = jnp.maximum(s2 * inv_m - mean * mean, 0.0)
            return mean, lax.rsqrt(var + EPS)

        def norm_plain(x):                    # affine folded into the following conv
            mean, rstd = freqnorm_stats(x)
            return (x - mean) * rstd

        def norm_affine(x, g, beta):
            mean, rstd = freqnorm_stats(x)
            return (x - mean) * (rstd * g) + beta

        # iota planes for the static shift / placement matrices
        rows_i = lax.broadcasted_iota(jnp.int32, (M, M), 0)
        cols_i = lax.broadcasted_iota(jnp.int32, (M, M), 1)
        rows_c = lax.broadcasted_iota(jnp.int32, (M, 1), 0)

        # ---- prenet: Embedding -> Conv1d(k=1) -> ReLU (emb @ pre_w folded offline) ----
        ids = ids_ref[...]                                                    # (M, 1) int32
        onehot = (ids == lax.broadcasted_iota(jnp.int32, (M, L.v_pad), 1)).astype(F32)
        e = jnp.maximum(
            jnp.dot(onehot, w_ref[L.emb:L.emb + L.v_pad, :],
                    preferred_element_type=F32) + vec(L.i_pre_b), 0.0)        # (M, C)

        # ---- residual blocks: 2x (dilated conv -> zero temporal pad -> ReLU -> FreqNorm)
        x = e
        for bi, d in enumerate(dilations):
            tv = T - d * (K - 1)              # valid conv length per sequence
            begin = (d * (K - 1)) // 2        # front pad

            # Static 0/1 matrices, built once per dilation, reused by both layers:
            #   S_s[m, n] = 1 iff n == m + s          (temporal shift, no wrap-around)
            #   P  [m, n] = 1 iff n == m - begin and row m is a non-pad row of its sequence
            # P places valid rows at their padded position, writes exact zeros into pad
            # rows and drops conv rows that straddled a batch boundary.
            S = [(cols_i == rows_i + k * d).astype(F32) for k in range(1, K)]
            valid = (rows_c >= begin) & (rows_c < begin + tv)
            for b in range(1, B):
                lo = b * T + begin
                valid = valid | ((rows_c >= lo) & (rows_c < lo + tv))
            P = (cols_i == rows_i - begin).astype(F32) * valid.astype(F32)

            res_in = x
            h = x
            for li in range(2):
                j = 2 * bi + li
                w_off = L.rbw + j * K * C
                # dilated conv as K accumulated MXU pushes (tap 0 needs no shift)
                y = (jnp.dot(h, wmat(w_off), preferred_element_type=F32)
                     + vec(L.i_conv_b + j))
                for k in range(1, K):
                    hs = jnp.dot(S[k - 1], h, preferred_element_type=F32)
                    y = y + jnp.dot(hs, wmat(w_off + k * C),
                                    preferred_element_type=F32)
                y = jnp.maximum(y, 0.0)       # ReLU(0)=0 == pad-then-ReLU on pad rows
                y = jnp.dot(P, y, preferred_element_type=F32)   # pad + boundary mask
                if li == 0:
                    h = norm_plain(y)         # affine folded into layer-1 conv
                else:
                    h = norm_affine(y, vec(L.i_g1 + bi), vec(L.i_beta1 + bi))
            x = res_in + h

        # ---- post_net1(x) + prenet skip ----
        x = (jnp.dot(x, wmat(L.pn1), preferred_element_type=F32)
             + vec(L.i_pn1_b) + e)

        # ---- post_net2: ReLU -> FreqNorm -> Conv1d(k=1) (affine folded into the conv) ----
        yn = norm_plain(jnp.maximum(x, 0.0))
        o_ref[...] = (jnp.dot(yn, wmat(L.pn2), preferred_element_type=F32)
                      + vec(L.i_pn2_b))

    return kernel


# ----------------------------- wrapper ---------------------------------------

def text_encoder_forward(ids, slab, *, B, T, C, V, K, dilations):
    M = B * T
    ids2 = ids.reshape(M, 1).astype(jnp.int32)
    kernel = make_text_encoder_kernel(B=B, T=T, C=C, V=V, K=K, dilations=dilations)
    out = pl.pallas_call(
        kernel,
        out_shape=jax.ShapeDtypeStruct((M, C), F32),
        grid=(1,),
        in_specs=[pl.BlockSpec(ids2.shape, lambda i: (0, 0)),
                  pl.BlockSpec(slab.shape, lambda i: (0, 0))],
        out_specs=pl.BlockSpec((M, C), lambda i: (0, 0)),
        compiler_params=pltpu.CompilerParams(dimension_semantics=("arbitrary",)),
    )(ids2, slab)
    return out.reshape(B, T, C)


# ----------------------------- params: init / fold / pack --------------------

def init_raw_params(key, *, V, C, K, dilations):
    """Random parameters in the PyTorch module's natural (un-folded) layout."""
    n_layers = 2 * len(dilations)
    ks = jax.random.split(key, 13)

    def nrm(k, shape, scale=0.1):
        return scale * jax.random.normal(k, shape, dtype=F32)

    emb = nrm(ks[0], (V, C), 0.2).at[0].set(0.0)            # padding_idx=0
    return dict(
        emb=emb,
        pre_w=nrm(ks[1], (C, C)), pre_b=nrm(ks[2], (C,)),
        # conv_w[j, k] = (C_in, C_out) weight of tap k of conv layer j
        # (layer order: (block0,layer0), (block0,layer1), (block1,layer0), ...)
        conv_w=nrm(ks[3], (n_layers, K, C, C)),
        conv_b=nrm(ks[4], (n_layers, C)),
        norm_g=1.0 + nrm(ks[5], (n_layers, C), 0.05),
        norm_beta=nrm(ks[6], (n_layers, C), 0.05),
        pn1_w=nrm(ks[7], (C, C)), pn1_b=nrm(ks[8], (C,)),
        pn2_g=1.0 + nrm(ks[9], (C,), 0.05),
        pn2_beta=nrm(ks[10], (C,), 0.05),
        pn2_w=nrm(ks[11], (C, C)), pn2_b=nrm(ks[12], (C,)),
    )


def pack_params(raw, *, V, C, K, dilations):
    """Fold what can be folded offline and pack everything into one (rows, C) f32 slab."""
    n_dil = len(dilations)
    L = _slab_offsets(V=V, C=C, K=K, n_dil=n_dil)
    hi = lax.Precision.HIGHEST
    slab = jnp.zeros((L.rows, C), F32)

    def set_vec(s, i, v):
        return s.at[L.vec + 8 * i, :].set(v)

    # Embedding folded into the prenet 1x1 conv (both are linear).
    slab = slab.at[L.emb:L.emb + V, :].set(jnp.dot(raw["emb"], raw["pre_w"], precision=hi))
    slab = set_vec(slab, L.i_pre_b, raw["pre_b"])

    for bi in range(n_dil):
        j0, j1 = 2 * bi, 2 * bi + 1
        g0, beta0 = raw["norm_g"][j0], raw["norm_beta"][j0]
        for k in range(K):
            slab = slab.at[L.rbw + (j0 * K + k) * C:
                           L.rbw + (j0 * K + k + 1) * C, :].set(raw["conv_w"][j0, k])
            # layer-0 FreqNorm gain folded into layer-1 conv weights (scale input rows)
            slab = slab.at[L.rbw + (j1 * K + k) * C:
                           L.rbw + (j1 * K + k + 1) * C, :].set(
                               g0[:, None] * raw["conv_w"][j1, k])
        slab = set_vec(slab, L.i_conv_b + j0, raw["conv_b"][j0])
        # layer-0 FreqNorm shift folded into layer-1 conv bias
        slab = set_vec(slab, L.i_conv_b + j1,
                       raw["conv_b"][j1]
                       + jnp.dot(beta0, raw["conv_w"][j1].sum(axis=0), precision=hi))
        slab = set_vec(slab, L.i_g1 + bi, raw["norm_g"][j1])
        slab = set_vec(slab, L.i_beta1 + bi, raw["norm_beta"][j1])

    slab = slab.at[L.pn1:L.pn1 + C, :].set(raw["pn1_w"])
    # post_net2 FreqNorm affine folded into the final 1x1 conv
    slab = slab.at[L.pn2:L.pn2 + C, :].set(raw["pn2_g"][:, None] * raw["pn2_w"])
    slab = set_vec(slab, L.i_pn1_b, raw["pn1_b"])
    slab = set_vec(slab, L.i_pn2_b,
                   raw["pn2_b"] + jnp.dot(raw["pn2_beta"], raw["pn2_w"], precision=hi))
    return slab


# ----------------------------- pure-JAX reference ----------------------------

def reference_forward(ids, p, *, T, K, dilations):
    """Pure-JAX replica of the PyTorch TextEncoder forward (training-mode BatchNorm)."""
    hi = lax.Precision.HIGHEST

    def conv1x1(x, w, b):
        return jnp.einsum("btc,cd->btd", x, w, precision=hi) + b

    def freqnorm(x, g, beta):
        mean = jnp.mean(x, axis=(0, 1), keepdims=True)
        var = jnp.mean(jnp.square(x - mean), axis=(0, 1), keepdims=True)
        return (x - mean) * lax.rsqrt(var + EPS) * g + beta

    e = jnp.maximum(conv1x1(p["emb"][ids], p["pre_w"], p["pre_b"]), 0.0)
    x = e
    for bi, d in enumerate(dilations):
        res, h = x, x
        for li in range(2):
            j = 2 * bi + li
            tv = T - d * (K - 1)
            y = sum(jnp.einsum("btc,cd->btd", h[:, k * d:k * d + tv, :],
                               p["conv_w"][j, k], precision=hi) for k in range(K))
            y = y + p["conv_b"][j]
            begin = (d * (K - 1)) // 2
            end = d * (K - 1) - begin
            y = jnp.pad(y, ((0, 0), (begin, end), (0, 0)))
            h = freqnorm(jnp.maximum(y, 0.0), p["norm_g"][j], p["norm_beta"][j])
        x = res + h
    x = conv1x1(x, p["pn1_w"], p["pn1_b"]) + e
    yn = freqnorm(jnp.maximum(x, 0.0), p["pn2_g"], p["pn2_beta"])
    return conv1x1(yn, p["pn2_w"], p["pn2_b"])


# ----------------------------- main ------------------------------------------

if __name__ == "__main__":
    # hp: alphabet_size=40, channels=32, enc_kernel_size=3, enc_dilations=(1,2,4),
    #     activation=ReLU, normalize=FreqNorm
    B, T, C, V, K = 2, 16, 32, 40, 3
    dilations = (1, 2, 4)

    key = jax.random.PRNGKey(0)
    k_params, k_ids = jax.random.split(key)
    raw = init_raw_params(k_params, V=V, C=C, K=K, dilations=dilations)
    slab = pack_params(raw, V=V, C=C, K=K, dilations=dilations)
    ids = jax.random.randint(k_ids, (B, T), 0, V, dtype=jnp.int32)   # token ids, 0 = pad

    fwd = jax.jit(functools.partial(text_encoder_forward,
                                    B=B, T=T, C=C, V=V, K=K, dilations=dilations))
    out = jax.block_until_ready(fwd(ids, slab))

    assert out.shape == (B, T, C), out.shape
    assert bool(jnp.all(jnp.isfinite(out)))

    # Correctness: compare against a pure-JAX replica of the PyTorch module using the
    # un-folded parameters.  Tolerance covers MXU pass precision + one-pass variance.
    ref = reference_forward(ids, raw, T=T, K=K, dilations=dilations)
    err = float(jnp.max(jnp.abs(out - ref)))
    assert err < 5e-2, f"kernel vs reference max abs err {err}"

    print("KERNEL_OK")
</pallas_src>

<mosaic_0001>
module attributes {stable_mosaic.version = 11 : i64} {
  func.func @kernel(%arg0: i32, %arg1: memref<32x1xi32, #tpu.memory_space<vmem>>, %arg2: memref<800x32xf32, #tpu.memory_space<vmem>>, %arg3: memref<32x32xf32, #tpu.memory_space<vmem>>) attributes {dimension_semantics = [#tpu.dimension_semantics<arbitrary>], iteration_bounds = array<i64: 1>, scalar_prefetch = 0 : i64, scratch_operands = 0 : i64, tpu.core_type = #tpu.core_type<tc>, window_params = [{pipeline_mode = #tpu.pipeline_mode<synchronous>, transform_indices = @transform_0, window_bounds = array<i64: 32, 1>}, {pipeline_mode = #tpu.pipeline_mode<synchronous>, transform_indices = @transform_1, window_bounds = array<i64: 800, 32>}, {pipeline_mode = #tpu.pipeline_mode<synchronous>, transform_indices = @transform_2, window_bounds = array<i64: 32, 32>}]} {
    %cst = arith.constant 1.000000e+00 : f32
    %0 = vector.broadcast %cst : f32 to vector<1x32xf32>
    %1 = tpu.iota {dimensions = array<i32: 0>} : vector<32x32xi32>
    %2 = tpu.iota {dimensions = array<i32: 1>} : vector<32x32xi32>
    %3 = tpu.iota {dimensions = array<i32: 0>} : vector<32x1xi32>
    %c0 = arith.constant 0 : index
    %c0_0 = arith.constant 0 : index
    %4 = vector.load %arg1[%c0, %c0_0] : memref<32x1xi32, #tpu.memory_space<vmem>>, vector<32x1xi32>
    %5 = tpu.iota {dimensions = array<i32: 1>} : vector<32x40xi32>
    %6 = vector.broadcast %4 : vector<32x1xi32> to vector<32x40xi32>
    %7 = arith.cmpi eq, %6, %5 : vector<32x40xi32>
    %8 = arith.extui %7 : vector<32x40xi1> to vector<32x40xi32>
    %9 = arith.sitofp %8 : vector<32x40xi32> to vector<32x40xf32>
    %c0_1 = arith.constant 0 : index
    %c0_2 = arith.constant 0 : index
    %10 = vector.load %arg2[%c0_1, %c0_2] : memref<800x32xf32, #tpu.memory_space<vmem>>, vector<40x32xf32>
    %cst_3 = arith.constant dense<0.000000e+00> : vector<32x32xf32>
    %11 = tpu.matmul %9, %10, %cst_3 {dimension_numbers = #tpu.dot_dimension_numbers<[1], [0], [0], [1], [0, 0, 1, 1], [], []>} : vector<32x40xf32>, vector<40x32xf32>, vector<32x32xf32> -> vector<32x32xf32>
    %c680 = arith.constant 680 : index
    %c0_4 = arith.constant 0 : index
    %12 = vector.load %arg2[%c680, %c0_4] : memref<800x32xf32, #tpu.memory_space<vmem>>, vector<1x32xf32>
    %13 = vector.broadcast %12 : vector<1x32xf32> to vector<32x32xf32>
    %14 = arith.addf %11, %13 : vector<32x32xf32>
    %cst_5 = arith.constant 0.000000e+00 : f32
    %15 = vector.broadcast %cst_5 : f32 to vector<32x32xf32>
    %16 = arith.maximumf %14, %15 : vector<32x32xf32>
    %c1_i32 = arith.constant 1 : i32
    %17 = vector.broadcast %c1_i32 : i32 to vector<32x32xi32>
    %18 = arith.addi %1, %17 : vector<32x32xi32>
    %19 = arith.cmpi eq, %2, %18 : vector<32x32xi32>
    %20 = arith.extui %19 : vector<32x32xi1> to vector<32x32xi32>
    %21 = arith.sitofp %20 : vector<32x32xi32> to vector<32x32xf32>
    %c2_i32 = arith.constant 2 : i32
    %22 = vector.broadcast %c2_i32 : i32 to vector<32x32xi32>
    %23 = arith.addi %1, %22 : vector<32x32xi32>
    %24 = arith.cmpi eq, %2, %23 : vector<32x32xi32>
    %25 = arith.extui %24 : vector<32x32xi1> to vector<32x32xi32>
    %26 = arith.sitofp %25 : vector<32x32xi32> to vector<32x32xf32>
    %c1_i32_6 = arith.constant 1 : i32
    %27 = vector.broadcast %c1_i32_6 : i32 to vector<32x1xi32>
    %28 = arith.cmpi sge, %3, %27 : vector<32x1xi32>
    %c15_i32 = arith.constant 15 : i32
    %29 = vector.broadcast %c15_i32 : i32 to vector<32x1xi32>
    %30 = arith.cmpi slt, %3, %29 : vector<32x1xi32>
    %31 = arith.andi %28, %30 : vector<32x1xi1>
    %c17_i32 = arith.constant 17 : i32
    %32 = vector.broadcast %c17_i32 : i32 to vector<32x1xi32>
    %33 = arith.cmpi sge, %3, %32 : vector<32x1xi32>
    %c31_i32 = arith.constant 31 : i32
    %34 = vector.broadcast %c31_i32 : i32 to vector<32x1xi32>
    %35 = arith.cmpi slt, %3, %34 : vector<32x1xi32>
    %36 = arith.andi %33, %35 : vector<32x1xi1>
    %37 = arith.ori %31, %36 : vector<32x1xi1>
    %c1_i32_7 = arith.constant 1 : i32
    %38 = vector.broadcast %c1_i32_7 : i32 to vector<32x32xi32>
    %39 = arith.subi %1, %38 : vector<32x32xi32>
    %40 = arith.cmpi eq, %2, %39 : vector<32x32xi32>
    %41 = arith.extui %40 : vector<32x32xi1> to vector<32x32xi32>
    %42 = arith.sitofp %41 : vector<32x32xi32> to vector<32x32xf32>
    %43 = arith.extui %37 : vector<32x1xi1> to vector<32x1xi32>
    %44 = arith.sitofp %43 : vector<32x1xi32> to vector<32x1xf32>
    %45 = vector.broadcast %44 : vector<32x1xf32> to vector<32x32xf32>
    %46 = arith.mulf %42, %45 : vector<32x32xf32>
    %c40 = arith.constant 40 : index
    %c0_8 = arith.constant 0 : index
    %47 = vector.load %arg2[%c40, %c0_8] : memref<800x32xf32, #tpu.memory_space<vmem>>, vector<32x32xf32>
    %cst_9 = arith.constant dense<0.000000e+00> : vector<32x32xf32>
    %48 = tpu.matmul %16, %47, %cst_9 {dimension_numbers = #tpu.dot_dimension_numbers<[1], [0], [0], [1], [0, 0, 1, 1], [], []>} : vector<32x32xf32>, vector<32x32xf32>, vector<32x32xf32> -> vector<32x32xf32>
    %c688 = arith.constant 688 : index
    %c0_10 = arith.constant 0 : index
    %49 = vector.load %arg2[%c688, %c0_10] : memref<800x32xf32, #tpu.memory_space<vmem>>, vector<1x32xf32>
    %50 = vector.broadcast %49 : vector<1x32xf32> to vector<32x32xf32>
    %51 = arith.addf %48, %50 : vector<32x32xf32>
    %cst_11 = arith.constant dense<0.000000e+00> : vector<32x32xf32>
    %52 = tpu.matmul %21, %16, %cst_11 {dimension_numbers = #tpu.dot_dimension_numbers<[1], [0], [0], [1], [0, 0, 1, 1], [], []>} : vector<32x32xf32>, vector<32x32xf32>, vector<32x32xf32> -> vector<32x32xf32>
    %c72 = arith.constant 72 : index
    %c0_12 = arith.constant 0 : index
    %53 = vector.load %arg2[%c72, %c0_12] : memref<800x32xf32, #tpu.memory_space<vmem>>, vector<32x32xf32>
    %cst_13 = arith.constant dense<0.000000e+00> : vector<32x32xf32>
    %54 = tpu.matmul %52, %53, %cst_13 {dimension_numbers = #tpu.dot_dimension_numbers<[1], [0], [0], [1], [0, 0, 1, 1], [], []>} : vector<32x32xf32>, vector<32x32xf32>, vector<32x32xf32> -> vector<32x32xf32>
    %55 = arith.addf %51, %54 : vector<32x32xf32>
    %cst_14 = arith.constant dense<0.000000e+00> : vector<32x32xf32>
    %56 = tpu.matmul %26, %16, %cst_14 {dimension_numbers = #tpu.dot_dimension_numbers<[1], [0], [0], [1], [0, 0, 1, 1], [], []>} : vector<32x32xf32>, vector<32x32xf32>, vector<32x32xf32> -> vector<32x32xf32>
    %c104 = arith.constant 104 : index
    %c0_15 = arith.constant 0 : index
    %57 = vector.load %arg2[%c104, %c0_15] : memref<800x32xf32, #tpu.memory_space<vmem>>, vector<32x32xf32>
    %cst_16 = arith.constant dense<0.000000e+00> : vector<32x32xf32>
    %58 = tpu.matmul %56, %57, %cst_16 {dimension_numbers = #tpu.dot_dimension_numbers<[1], [0], [0], [1], [0, 0, 1, 1], [], []>} : vector<32x32xf32>, vector<32x32xf32>, vector<32x32xf32> -> vector<32x32xf32>
    %59 = arith.addf %55, %58 : vector<32x32xf32>
    %cst_17 = arith.constant 0.000000e+00 : f32
    %60 = vector.broadcast %cst_17 : f32 to vector<32x32xf32>
    %61 = arith.maximumf %59, %60 : vector<32x32xf32>
    %cst_18 = arith.constant dense<0.000000e+00> : vector<32x32xf32>
    %62 = tpu.matmul %46, %61, %cst_18 {dimension_numbers = #tpu.dot_dimension_numbers<[1], [0], [0], [1], [0, 0, 1, 1], [], []>} : vector<32x32xf32>, vector<32x32xf32>, vector<32x32xf32> -> vector<32x32xf32>
    %cst_19 = arith.constant dense<0.000000e+00> : vector<1x32xf32>
    %63 = tpu.matmul %0, %62, %cst_19 {dimension_numbers = #tpu.dot_dimension_numbers<[1], [0], [0], [1], [0, 0, 1, 1], [], []>} : vector<1x32xf32>, vector<32x32xf32>, vector<1x32xf32> -> vector<1x32xf32>
    %64 = arith.mulf %62, %62 : vector<32x32xf32>
    %cst_20 = arith.constant dense<0.000000e+00> : vector<1x32xf32>
    %65 = tpu.matmul %0, %64, %cst_20 {dimension_numbers = #tpu.dot_dimension_numbers<[1], [0], [0], [1], [0, 0, 1, 1], [], []>} : vector<1x32xf32>, vector<32x32xf32>, vector<1x32xf32> -> vector<1x32xf32>
    %cst_21 = arith.constant 3.125000e-02 : f32
    %66 = vector.broadcast %cst_21 : f32 to vector<1x32xf32>
    %67 = arith.mulf %63, %66 : vector<1x32xf32>
    %cst_22 = arith.constant 3.125000e-02 : f32
    %68 = vector.broadcast %cst_22 : f32 to vector<1x32xf32>
    %69 = arith.mulf %65, %68 : vector<1x32xf32>
    %70 = arith.mulf %67, %67 : vector<1x32xf32>
    %71 = arith.subf %69, %70 : vector<1x32xf32>
    %cst_23 = arith.constant 0.000000e+00 : f32
    %72 = vector.broadcast %cst_23 : f32 to vector<1x32xf32>
    %73 = arith.maximumf %71, %72 : vector<1x32xf32>
    %cst_24 = arith.constant 9.99999974E-6 : f32
    %74 = vector.broadcast %cst_24 : f32 to vector<1x32xf32>
    %75 = arith.addf %73, %74 : vector<1x32xf32>
    %76 = math.rsqrt %75 : vector<1x32xf32>
    %77 = vector.broadcast %67 : vector<1x32xf32> to vector<32x32xf32>
    %78 = arith.subf %62, %77 : vector<32x32xf32>
    %79 = vector.broadcast %76 : vector<1x32xf32> to vector<32x32xf32>
    %80 = arith.mulf %78, %79 : vector<32x32xf32>
    %c136 = arith.constant 136 : index
    %c0_25 = arith.constant 0 : index
    %81 = vector.load %arg2[%c136, %c0_25] : memref<800x32xf32, #tpu.memory_space<vmem>>, vector<32x32xf32>
    %cst_26 = arith.constant dense<0.000000e+00> : vector<32x32xf32>
    %82 = tpu.matmul %80, %81, %cst_26 {dimension_numbers = #tpu.dot_dimension_numbers<[1], [0], [0], [1], [0, 0, 1, 1], [], []>} : vector<32x32xf32>, vector<32x32xf32>, vector<32x32xf32> -> vector<32x32xf32>
    %c696 = arith.constant 696 : index
    %c0_27 = arith.constant 0 : index
    %83 = vector.load %arg2[%c696, %c0_27] : memref<800x32xf32, #tpu.memory_space<vmem>>, vector<1x32xf32>
    %84 = vector.broadcast %83 : vector<1x32xf32> to vector<32x32xf32>
    %85 = arith.addf %82, %84 : vector<32x32xf32>
    %cst_28 = arith.constant dense<0.000000e+00> : vector<32x32xf32>
    %86 = tpu.matmul %21, %80, %cst_28 {dimension_numbers = #tpu.dot_dimension_numbers<[1], [0], [0], [1], [0, 0, 1, 1], [], []>} : vector<32x32xf32>, vector<32x32xf32>, vector<32x32xf32> -> vector<32x32xf32>
    %c168 = arith.constant 168 : index
    %c0_29 = arith.constant 0 : index
    %87 = vector.load %arg2[%c168, %c0_29] : memref<800x32xf32, #tpu.memory_space<vmem>>, vector<32x32xf32>
    %cst_30 = arith.constant dense<0.000000e+00> : vector<32x32xf32>
    %88 = tpu.matmul %86, %87, %cst_30 {dimension_numbers = #tpu.dot_dimension_numbers<[1], [0], [0], [1], [0, 0, 1, 1], [], []>} : vector<32x32xf32>, vector<32x32xf32>, vector<32x32xf32> -> vector<32x32xf32>
    %89 = arith.addf %85, %88 : vector<32x32xf32>
    %cst_31 = arith.constant dense<0.000000e+00> : vector<32x32xf32>
    %90 = tpu.matmul %26, %80, %cst_31 {dimension_numbers = #tpu.dot_dimension_numbers<[1], [0], [0], [1], [0, 0, 1, 1], [], []>} : vector<32x32xf32>, vector<32x32xf32>, vector<32x32xf32> -> vector<32x32xf32>
    %c200 = arith.constant 200 : index
    %c0_32 = arith.constant 0 : index
    %91 = vector.load %arg2[%c200, %c0_32] : memref<800x32xf32, #tpu.memory_space<vmem>>, vector<32x32xf32>
    %cst_33 = arith.constant dense<0.000000e+00> : vector<32x32xf32>
    %92 = tpu.matmul %90, %91, %cst_33 {dimension_numbers = #tpu.dot_dimension_numbers<[1], [0], [0], [1], [0, 0, 1, 1], [], []>} : vector<32x32xf32>, vector<32x32xf32>, vector<32x32xf32> -> vector<32x32xf32>
    %93 = arith.addf %89, %92 : vector<32x32xf32>
    %cst_34 = arith.constant 0.000000e+00 : f32
    %94 = vector.broadcast %cst_34 : f32 to vector<32x32xf32>
    %95 = arith.maximumf %93, %94 : vector<32x32xf32>
    %cst_35 = arith.constant dense<0.000000e+00> : vector<32x32xf32>
    %96 = tpu.matmul %46, %95, %cst_35 {dimension_numbers = #tpu.dot_dimension_numbers<[1], [0], [0], [1], [0, 0, 1, 1], [], []>} : vector<32x32xf32>, vector<32x32xf32>, vector<32x32xf32> -> vector<32x32xf32>
    %c736 = arith.constant 736 : index
    %c0_36 = arith.constant 0 : index
    %97 = vector.load %arg2[%c736, %c0_36] : memref<800x32xf32, #tpu.memory_space<vmem>>, vector<1x32xf32>
    %c760 = arith.constant 760 : index
    %c0_37 = arith.constant 0 : index
    %98 = vector.load %arg2[%c760, %c0_37] : memref<800x32xf32, #tpu.memory_space<vmem>>, vector<1x32xf32>
    %cst_38 = arith.constant dense<0.000000e+00> : vector<1x32xf32>
    %99 = tpu.matmul %0, %96, %cst_38 {dimension_numbers = #tpu.dot_dimension_numbers<[1], [0], [0], [1], [0, 0, 1, 1], [], []>} : vector<1x32xf32>, vector<32x32xf32>, vector<1x32xf32> -> vector<1x32xf32>
    %100 = arith.mulf %96, %96 : vector<32x32xf32>
    %cst_39 = arith.constant dense<0.000000e+00> : vector<1x32xf32>
    %101 = tpu.matmul %0, %100, %cst_39 {dimension_numbers = #tpu.dot_dimension_numbers<[1], [0], [0], [1], [0, 0, 1, 1], [], []>} : vector<1x32xf32>, vector<32x32xf32>, vector<1x32xf32> -> vector<1x32xf32>
    %cst_40 = arith.constant 3.125000e-02 : f32
    %102 = vector.broadcast %cst_40 : f32 to vector<1x32xf32>
    %103 = arith.mulf %99, %102 : vector<1x32xf32>
    %cst_41 = arith.constant 3.125000e-02 : f32
    %104 = vector.broadcast %cst_41 : f32 to vector<1x32xf32>
    %105 = arith.mulf %101, %104 : vector<1x32xf32>
    %106 = arith.mulf %103, %103 : vector<1x32xf32>
    %107 = arith.subf %105, %106 : vector<1x32xf32>
    %cst_42 = arith.constant 0.000000e+00 : f32
    %108 = vector.broadcast %cst_42 : f32 to vector<1x32xf32>
    %109 = arith.maximumf %107, %108 : vector<1x32xf32>
    %cst_43 = arith.constant 9.99999974E-6 : f32
    %110 = vector.broadcast %cst_43 : f32 to vector<1x32xf32>
    %111 = arith.addf %109, %110 : vector<1x32xf32>
    %112 = math.rsqrt %111 : vector<1x32xf32>
    %113 = vector.broadcast %103 : vector<1x32xf32> to vector<32x32xf32>
    %114 = arith.subf %96, %113 : vector<32x32xf32>
    %115 = arith.mulf %112, %97 : vector<1x32xf32>
    %116 = vector.broadcast %115 : vector<1x32xf32> to vector<32x32xf32>
    %117 = arith.mulf %114, %116 : vector<32x32xf32>
    %118 = vector.broadcast %98 : vector<1x32xf32> to vector<32x32xf32>
    %119 = arith.addf %117, %118 : vector<32x32xf32>
    %120 = arith.addf %16, %119 : vector<32x32xf32>
    %c2_i32_44 = arith.constant 2 : i32
    %121 = vector.broadcast %c2_i32_44 : i32 to vector<32x32xi32>
    %122 = arith.addi %1, %121 : vector<32x32xi32>
    %123 = arith.cmpi eq, %2, %122 : vector<32x32xi32>
    %124 = arith.extui %123 : vector<32x32xi1> to vector<32x32xi32>
    %125 = arith.sitofp %124 : vector<32x32xi32> to vector<32x32xf32>
    %c4_i32 = arith.constant 4 : i32
    %126 = vector.broadcast %c4_i32 : i32 to vector<32x32xi32>
    %127 = arith.addi %1, %126 : vector<32x32xi32>
    %128 = arith.cmpi eq, %2, %127 : vector<32x32xi32>
    %129 = arith.extui %128 : vector<32x32xi1> to vector<32x32xi32>
    %130 = arith.sitofp %129 : vector<32x32xi32> to vector<32x32xf32>
    %c2_i32_45 = arith.constant 2 : i32
    %131 = vector.broadcast %c2_i32_45 : i32 to vector<32x1xi32>
    %132 = arith.cmpi sge, %3, %131 : vector<32x1xi32>
    %c14_i32 = arith.constant 14 : i32
    %133 = vector.broadcast %c14_i32 : i32 to vector<32x1xi32>
    %134 = arith.cmpi slt, %3, %133 : vector<32x1xi32>
    %135 = arith.andi %132, %134 : vector<32x1xi1>
    %c18_i32 = arith.constant 18 : i32
    %136 = vector.broadcast %c18_i32 : i32 to vector<32x1xi32>
    %137 = arith.cmpi sge, %3, %136 : vector<32x1xi32>
    %c30_i32 = arith.constant 30 : i32
    %138 = vector.broadcast %c30_i32 : i32 to vector<32x1xi32>
    %139 = arith.cmpi slt, %3, %138 : vector<32x1xi32>
    %140 = arith.andi %137, %139 : vector<32x1xi1>
    %141 = arith.ori %135, %140 : vector<32x1xi1>
    %c2_i32_46 = arith.constant 2 : i32
    %142 = vector.broadcast %c2_i32_46 : i32 to vector<32x32xi32>
    %143 = arith.subi %1, %142 : vector<32x32xi32>
    %144 = arith.cmpi eq, %2, %143 : vector<32x32xi32>
    %145 = arith.extui %144 : vector<32x32xi1> to vector<32x32xi32>
    %146 = arith.sitofp %145 : vector<32x32xi32> to vector<32x32xf32>
    %147 = arith.extui %141 : vector<32x1xi1> to vector<32x1xi32>
    %148 = arith.sitofp %147 : vector<32x1xi32> to vector<32x1xf32>
    %149 = vector.broadcast %148 : vector<32x1xf32> to vector<32x32xf32>
    %150 = arith.mulf %146, %149 : vector<32x32xf32>
    %c232 = arith.constant 232 : index
    %c0_47 = arith.constant 0 : index
    %151 = vector.load %arg2[%c232, %c0_47] : memref<800x32xf32, #tpu.memory_space<vmem>>, vector<32x32xf32>
    %cst_48 = arith.constant dense<0.000000e+00> : vector<32x32xf32>
    %152 = tpu.matmul %120, %151, %cst_48 {dimension_numbers = #tpu.dot_dimension_numbers<[1], [0], [0], [1], [0, 0, 1, 1], [], []>} : vector<32x32xf32>, vector<32x32xf32>, vector<32x32xf32> -> vector<32x32xf32>
    %c704 = arith.constant 704 : index
    %c0_49 = arith.constant 0 : index
    %153 = vector.load %arg2[%c704, %c0_49] : memref<800x32xf32, #tpu.memory_space<vmem>>, vector<1x32xf32>
    %154 = vector.broadcast %153 : vector<1x32xf32> to vector<32x32xf32>
    %155 = arith.addf %152, %154 : vector<32x32xf32>
    %cst_50 = arith.constant dense<0.000000e+00> : vector<32x32xf32>
    %156 = tpu.matmul %125, %120, %cst_50 {dimension_numbers = #tpu.dot_dimension_numbers<[1], [0], [0], [1], [0, 0, 1, 1], [], []>} : vector<32x32xf32>, vector<32x32xf32>, vector<32x32xf32> -> vector<32x32xf32>
    %c264 = arith.constant 264 : index
    %c0_51 = arith.constant 0 : index
    %157 = vector.load %arg2[%c264, %c0_51] : memref<800x32xf32, #tpu.memory_space<vmem>>, vector<32x32xf32>
    %cst_52 = arith.constant dense<0.000000e+00> : vector<32x32xf32>
    %158 = tpu.matmul %156, %157, %cst_52 {dimension_numbers = #tpu.dot_dimension_numbers<[1], [0], [0], [1], [0, 0, 1, 1], [], []>} : vector<32x32xf32>, vector<32x32xf32>, vector<32x32xf32> -> vector<32x32xf32>
    %159 = arith.addf %155, %158 : vector<32x32xf32>
    %cst_53 = arith.constant dense<0.000000e+00> : vector<32x32xf32>
    %160 = tpu.matmul %130, %120, %cst_53 {dimension_numbers = #tpu.dot_dimension_numbers<[1], [0], [0], [1], [0, 0, 1, 1], [], []>} : vector<32x32xf32>, vector<32x32xf32>, vector<32x32xf32> -> vector<32x32xf32>
    %c296 = arith.constant 296 : index
    %c0_54 = arith.constant 0 : index
    %161 = vector.load %arg2[%c296, %c0_54] : memref<800x32xf32, #tpu.memory_space<vmem>>, vector<32x32xf32>
    %cst_55 = arith.constant dense<0.000000e+00> : vector<32x32xf32>
    %162 = tpu.matmul %160, %161, %cst_55 {dimension_numbers = #tpu.dot_dimension_numbers<[1], [0], [0], [1], [0, 0, 1, 1], [], []>} : vector<32x32xf32>, vector<32x32xf32>, vector<32x32xf32> -> vector<32x32xf32>
    %163 = arith.addf %159, %162 : vector<32x32xf32>
    %cst_56 = arith.constant 0.000000e+00 : f32
    %164 = vector.broadcast %cst_56 : f32 to vector<32x32xf32>
    %165 = arith.maximumf %163, %164 : vector<32x32xf32>
    %cst_57 = arith.constant dense<0.000000e+00> : vector<32x32xf32>
    %166 = tpu.matmul %150, %165, %cst_57 {dimension_numbers = #tpu.dot_dimension_numbers<[1], [0], [0], [1], [0, 0, 1, 1], [], []>} : vector<32x32xf32>, vector<32x32xf32>, vector<32x32xf32> -> vector<32x32xf32>
    %cst_58 = arith.constant dense<0.000000e+00> : vector<1x32xf32>
    %167 = tpu.matmul %0, %166, %cst_58 {dimension_numbers = #tpu.dot_dimension_numbers<[1], [0], [0], [1], [0, 0, 1, 1], [], []>} : vector<1x32xf32>, vector<32x32xf32>, vector<1x32xf32> -> vector<1x32xf32>
    %168 = arith.mulf %166, %166 : vector<32x32xf32>
    %cst_59 = arith.constant dense<0.000000e+00> : vector<1x32xf32>
    %169 = tpu.matmul %0, %168, %cst_59 {dimension_numbers = #tpu.dot_dimension_numbers<[1], [0], [0], [1], [0, 0, 1, 1], [], []>} : vector<1x32xf32>, vector<32x32xf32>, vector<1x32xf32> -> vector<1x32xf32>
    %cst_60 = arith.constant 3.125000e-02 : f32
    %170 = vector.broadcast %cst_60 : f32 to vector<1x32xf32>
    %171 = arith.mulf %167, %170 : vector<1x32xf32>
    %cst_61 = arith.constant 3.125000e-02 : f32
    %172 = vector.broadcast %cst_61 : f32 to vector<1x32xf32>
    %173 = arith.mulf %169, %172 : vector<1x32xf32>
    %174 = arith.mulf %171, %171 : vector<1x32xf32>
    %175 = arith.subf %173, %174 : vector<1x32xf32>
    %cst_62 = arith.constant 0.000000e+00 : f32
    %176 = vector.broadcast %cst_62 : f32 to vector<1x32xf32>
    %177 = arith.maximumf %175, %176 : vector<1x32xf32>
    %cst_63 = arith.constant 9.99999974E-6 : f32
    %178 = vector.broadcast %cst_63 : f32 to vector<1x32xf32>
    %179 = arith.addf %177, %178 : vector<1x32xf32>
    %180 = math.rsqrt %179 : vector<1x32xf32>
    %181 = vector.broadcast %171 : vector<1x32xf32> to vector<32x32xf32>
    %182 = arith.subf %166, %181 : vector<32x32xf32>
    %183 = vector.broadcast %180 : vector<1x32xf32> to vector<32x32xf32>
    %184 = arith.mulf %182, %183 : vector<32x32xf32>
    %c328 = arith.constant 328 : index
    %c0_64 = arith.constant 0 : index
    %185 = vector.load %arg2[%c328, %c0_64] : memref<800x32xf32, #tpu.memory_space<vmem>>, vector<32x32xf32>
    %cst_65 = arith.constant dense<0.000000e+00> : vector<32x32xf32>
    %186 = tpu.matmul %184, %185, %cst_65 {dimension_numbers = #tpu.dot_dimension_numbers<[1], [0], [0], [1], [0, 0, 1, 1], [], []>} : vector<32x32xf32>, vector<32x32xf32>, vector<32x32xf32> -> vector<32x32xf32>
    %c712 = arith.constant 712 : index
    %c0_66 = arith.constant 0 : index
    %187 = vector.load %arg2[%c712, %c0_66] : memref<800x32xf32, #tpu.memory_space<vmem>>, vector<1x32xf32>
    %188 = vector.broadcast %187 : vector<1x32xf32> to vector<32x32xf32>
    %189 = arith.addf %186, %188 : vector<32x32xf32>
    %cst_67 = arith.constant dense<0.000000e+00> : vector<32x32xf32>
    %190 = tpu.matmul %125, %184, %cst_67 {dimension_numbers = #tpu.dot_dimension_numbers<[1], [0], [0], [1], [0, 0, 1, 1], [], []>} : vector<32x32xf32>, vector<32x32xf32>, vector<32x32xf32> -> vector<32x32xf32>
    %c360 = arith.constant 360 : index
    %c0_68 = arith.constant 0 : index
    %191 = vector.load %arg2[%c360, %c0_68] : memref<800x32xf32, #tpu.memory_space<vmem>>, vector<32x32xf32>
    %cst_69 = arith.constant dense<0.000000e+00> : vector<32x32xf32>
    %192 = tpu.matmul %190, %191, %cst_69 {dimension_numbers = #tpu.dot_dimension_numbers<[1], [0], [0], [1], [0, 0, 1, 1], [], []>} : vector<32x32xf32>, vector<32x32xf32>, vector<32x32xf32> -> vector<32x32xf32>
    %193 = arith.addf %189, %192 : vector<32x32xf32>
    %cst_70 = arith.constant dense<0.000000e+00> : vector<32x32xf32>
    %194 = tpu.matmul %130, %184, %cst_70 {dimension_numbers = #tpu.dot_dimension_numbers<[1], [0], [0], [1], [0, 0, 1, 1], [], []>} : vector<32x32xf32>, vector<32x32xf32>, vector<32x32xf32> -> vector<32x32xf32>
    %c392 = arith.constant 392 : index
    %c0_71 = arith.constant 0 : index
    %195 = vector.load %arg2[%c392, %c0_71] : memref<800x32xf32, #tpu.memory_space<vmem>>, vector<32x32xf32>
    %cst_72 = arith.constant dense<0.000000e+00> : vector<32x32xf32>
    %196 = tpu.matmul %194, %195, %cst_72 {dimension_numbers = #tpu.dot_dimension_numbers<[1], [0], [0], [1], [0, 0, 1, 1], [], []>} : vector<32x32xf32>, vector<32x32xf32>, vector<32x32xf32> -> vector<32x32xf32>
    %197 = arith.addf %193, %196 : vector<32x32xf32>
    %cst_73 = arith.constant 0.000000e+00 : f32
    %198 = vector.broadcast %cst_73 : f32 to vector<32x32xf32>
    %199 = arith.maximumf %197, %198 : vector<32x32xf32>
    %cst_74 = arith.constant dense<0.000000e+00> : vector<32x32xf32>
    %200 = tpu.matmul %150, %199, %cst_74 {dimension_numbers = #tpu.dot_dimension_numbers<[1], [0], [0], [1], [0, 0, 1, 1], [], []>} : vector<32x32xf32>, vector<32x32xf32>, vector<32x32xf32> -> vector<32x32xf32>
    %c744 = arith.constant 744 : index
    %c0_75 = arith.constant 0 : index
    %201 = vector.load %arg2[%c744, %c0_75] : memref<800x32xf32, #tpu.memory_space<vmem>>, vector<1x32xf32>
    %c768 = arith.constant 768 : index
    %c0_76 = arith.constant 0 : index
    %202 = vector.load %arg2[%c768, %c0_76] : memref<800x32xf32, #tpu.memory_space<vmem>>, vector<1x32xf32>
    %cst_77 = arith.constant dense<0.000000e+00> : vector<1x32xf32>
    %203 = tpu.matmul %0, %200, %cst_77 {dimension_numbers = #tpu.dot_dimension_numbers<[1], [0], [0], [1], [0, 0, 1, 1], [], []>} : vector<1x32xf32>, vector<32x32xf32>, vector<1x32xf32> -> vector<1x32xf32>
    %204 = arith.mulf %200, %200 : vector<32x32xf32>
    %cst_78 = arith.constant dense<0.000000e+00> : vector<1x32xf32>
    %205 = tpu.matmul %0, %204, %cst_78 {dimension_numbers = #tpu.dot_dimension_numbers<[1], [0], [0], [1], [0, 0, 1, 1], [], []>} : vector<1x32xf32>, vector<32x32xf32>, vector<1x32xf32> -> vector<1x32xf32>
    %cst_79 = arith.constant 3.125000e-02 : f32
    %206 = vector.broadcast %cst_79 : f32 to vector<1x32xf32>
    %207 = arith.mulf %203, %206 : vector<1x32xf32>
    %cst_80 = arith.constant 3.125000e-02 : f32
    %208 = vector.broadcast %cst_80 : f32 to vector<1x32xf32>
    %209 = arith.mulf %205, %208 : vector<1x32xf32>
    %210 = arith.mulf %207, %207 : vector<1x32xf32>
    %211 = arith.subf %209, %210 : vector<1x32xf32>
    %cst_81 = arith.constant 0.000000e+00 : f32
    %212 = vector.broadcast %cst_81 : f32 to vector<1x32xf32>
    %213 = arith.maximumf %211, %212 : vector<1x32xf32>
    %cst_82 = arith.constant 9.99999974E-6 : f32
    %214 = vector.broadcast %cst_82 : f32 to vector<1x32xf32>
    %215 = arith.addf %213, %214 : vector<1x32xf32>
    %216 = math.rsqrt %215 : vector<1x32xf32>
    %217 = vector.broadcast %207 : vector<1x32xf32> to vector<32x32xf32>
    %218 = arith.subf %200, %217 : vector<32x32xf32>
    %219 = arith.mulf %216, %201 : vector<1x32xf32>
    %220 = vector.broadcast %219 : vector<1x32xf32> to vector<32x32xf32>
    %221 = arith.mulf %218, %220 : vector<32x32xf32>
    %222 = vector.broadcast %202 : vector<1x32xf32> to vector<32x32xf32>
    %223 = arith.addf %221, %222 : vector<32x32xf32>
    %224 = arith.addf %120, %223 : vector<32x32xf32>
    %c4_i32_83 = arith.constant 4 : i32
    %225 = vector.broadcast %c4_i32_83 : i32 to vector<32x32xi32>
    %226 = arith.addi %1, %225 : vector<32x32xi32>
    %227 = arith.cmpi eq, %2, %226 : vector<32x32xi32>
    %228 = arith.extui %227 : vector<32x32xi1> to vector<32x32xi32>
    %229 = arith.sitofp %228 : vector<32x32xi32> to vector<32x32xf32>
    %c8_i32 = arith.constant 8 : i32
    %230 = vector.broadcast %c8_i32 : i32 to vector<32x32xi32>
    %231 = arith.addi %1, %230 : vector<32x32xi32>
    %232 = arith.cmpi eq, %2, %231 : vector<32x32xi32>
    %233 = arith.extui %232 : vector<32x32xi1> to vector<32x32xi32>
    %234 = arith.sitofp %233 : vector<32x32xi32> to vector<32x32xf32>
    %c4_i32_84 = arith.constant 4 : i32
    %235 = vector.broadcast %c4_i32_84 : i32 to vector<32x1xi32>
    %236 = arith.cmpi sge, %3, %235 : vector<32x1xi32>
    %c12_i32 = arith.constant 12 : i32
    %237 = vector.broadcast %c12_i32 : i32 to vector<32x1xi32>
    %238 = arith.cmpi slt, %3, %237 : vector<32x1xi32>
    %239 = arith.andi %236, %238 : vector<32x1xi1>
    %c20_i32 = arith.constant 20 : i32
    %240 = vector.broadcast %c20_i32 : i32 to vector<32x1xi32>
    %241 = arith.cmpi sge, %3, %240 : vector<32x1xi32>
    %c28_i32 = arith.constant 28 : i32
    %242 = vector.broadcast %c28_i32 : i32 to vector<32x1xi32>
    %243 = arith.cmpi slt, %3, %242 : vector<32x1xi32>
    %244 = arith.andi %241, %243 : vector<32x1xi1>
    %245 = arith.ori %239, %244 : vector<32x1xi1>
    %c4_i32_85 = arith.constant 4 : i32
    %246 = vector.broadcast %c4_i32_85 : i32 to vector<32x32xi32>
    %247 = arith.subi %1, %246 : vector<32x32xi32>
    %248 = arith.cmpi eq, %2, %247 : vector<32x32xi32>
    %249 = arith.extui %248 : vector<32x32xi1> to vector<32x32xi32>
    %250 = arith.sitofp %249 : vector<32x32xi32> to vector<32x32xf32>
    %251 = arith.extui %245 : vector<32x1xi1> to vector<32x1xi32>
    %252 = arith.sitofp %251 : vector<32x1xi32> to vector<32x1xf32>
    %253 = vector.broadcast %252 : vector<32x1xf32> to vector<32x32xf32>
    %254 = arith.mulf %250, %253 : vector<32x32xf32>
    %c424 = arith.constant 424 : index
    %c0_86 = arith.constant 0 : index
    %255 = vector.load %arg2[%c424, %c0_86] : memref<800x32xf32, #tpu.memory_space<vmem>>, vector<32x32xf32>
    %cst_87 = arith.constant dense<0.000000e+00> : vector<32x32xf32>
    %256 = tpu.matmul %224, %255, %cst_87 {dimension_numbers = #tpu.dot_dimension_numbers<[1], [0], [0], [1], [0, 0, 1, 1], [], []>} : vector<32x32xf32>, vector<32x32xf32>, vector<32x32xf32> -> vector<32x32xf32>
    %c720 = arith.constant 720 : index
    %c0_88 = arith.constant 0 : index
    %257 = vector.load %arg2[%c720, %c0_88] : memref<800x32xf32, #tpu.memory_space<vmem>>, vector<1x32xf32>
    %258 = vector.broadcast %257 : vector<1x32xf32> to vector<32x32xf32>
    %259 = arith.addf %256, %258 : vector<32x32xf32>
    %cst_89 = arith.constant dense<0.000000e+00> : vector<32x32xf32>
    %260 = tpu.matmul %229, %224, %cst_89 {dimension_numbers = #tpu.dot_dimension_numbers<[1], [0], [0], [1], [0, 0, 1, 1], [], []>} : vector<32x32xf32>, vector<32x32xf32>, vector<32x32xf32> -> vector<32x32xf32>
    %c456 = arith.constant 456 : index
    %c0_90 = arith.constant 0 : index
    %261 = vector.load %arg2[%c456, %c0_90] : memref<800x32xf32, #tpu.memory_space<vmem>>, vector<32x32xf32>
    %cst_91 = arith.constant dense<0.000000e+00> : vector<32x32xf32>
    %262 = tpu.matmul %260, %261, %cst_91 {dimension_numbers = #tpu.dot_dimension_numbers<[1], [0], [0], [1], [0, 0, 1, 1], [], []>} : vector<32x32xf32>, vector<32x32xf32>, vector<32x32xf32> -> vector<32x32xf32>
    %263 = arith.addf %259, %262 : vector<32x32xf32>
    %cst_92 = arith.constant dense<0.000000e+00> : vector<32x32xf32>
    %264 = tpu.matmul %234, %224, %cst_92 {dimension_numbers = #tpu.dot_dimension_numbers<[1], [0], [0], [1], [0, 0, 1, 1], [], []>} : vector<32x32xf32>, vector<32x32xf32>, vector<32x32xf32> -> vector<32x32xf32>
    %c488 = arith.constant 488 : index
    %c0_93 = arith.constant 0 : index
    %265 = vector.load %arg2[%c488, %c0_93] : memref<800x32xf32, #tpu.memory_space<vmem>>, vector<32x32xf32>
    %cst_94 = arith.constant dense<0.000000e+00> : vector<32x32xf32>
    %266 = tpu.matmul %264, %265, %cst_94 {dimension_numbers = #tpu.dot_dimension_numbers<[1], [0], [0], [1], [0, 0, 1, 1], [], []>} : vector<32x32xf32>, vector<32x32xf32>, vector<32x32xf32> -> vector<32x32xf32>
    %267 = arith.addf %263, %266 : vector<32x32xf32>
    %cst_95 = arith.constant 0.000000e+00 : f32
    %268 = vector.broadcast %cst_95 : f32 to vector<32x32xf32>
    %269 = arith.maximumf %267, %268 : vector<32x32xf32>
    %cst_96 = arith.constant dense<0.000000e+00> : vector<32x32xf32>
    %270 = tpu.matmul %254, %269, %cst_96 {dimension_numbers = #tpu.dot_dimension_numbers<[1], [0], [0], [1], [0, 0, 1, 1], [], []>} : vector<32x32xf32>, vector<32x32xf32>, vector<32x32xf32> -> vector<32x32xf32>
    %cst_97 = arith.constant dense<0.000000e+00> : vector<1x32xf32>
    %271 = tpu.matmul %0, %270, %cst_97 {dimension_numbers = #tpu.dot_dimension_numbers<[1], [0], [0], [1], [0, 0, 1, 1], [], []>} : vector<1x32xf32>, vector<32x32xf32>, vector<1x32xf32> -> vector<1x32xf32>
    %272 = arith.mulf %270, %270 : vector<32x32xf32>
    %cst_98 = arith.constant dense<0.000000e+00> : vector<1x32xf32>
    %273 = tpu.matmul %0, %272, %cst_98 {dimension_numbers = #tpu.dot_dimension_numbers<[1], [0], [0], [1], [0, 0, 1, 1], [], []>} : vector<1x32xf32>, vector<32x32xf32>, vector<1x32xf32> -> vector<1x32xf32>
    %cst_99 = arith.constant 3.125000e-02 : f32
    %274 = vector.broadcast %cst_99 : f32 to vector<1x32xf32>
    %275 = arith.mulf %271, %274 : vector<1x32xf32>
    %cst_100 = arith.constant 3.125000e-02 : f32
    %276 = vector.broadcast %cst_100 : f32 to vector<1x32xf32>
    %277 = arith.mulf %273, %276 : vector<1x32xf32>
    %278 = arith.mulf %275, %275 : vector<1x32xf32>
    %279 = arith.subf %277, %278 : vector<1x32xf32>
    %cst_101 = arith.constant 0.000000e+00 : f32
    %280 = vector.broadcast %cst_101 : f32 to vector<1x32xf32>
    %281 = arith.maximumf %279, %280 : vector<1x32xf32>
    %cst_102 = arith.constant 9.99999974E-6 : f32
    %282 = vector.broadcast %cst_102 : f32 to vector<1x32xf32>
    %283 = arith.addf %281, %282 : vector<1x32xf32>
    %284 = math.rsqrt %283 : vector<1x32xf32>
    %285 = vector.broadcast %275 : vector<1x32xf32> to vector<32x32xf32>
    %286 = arith.subf %270, %285 : vector<32x32xf32>
    %287 = vector.broadcast %284 : vector<1x32xf32> to vector<32x32xf32>
    %288 = arith.mulf %286, %287 : vector<32x32xf32>
    %c520 = arith.constant 520 : index
    %c0_103 = arith.constant 0 : index
    %289 = vector.load %arg2[%c520, %c0_103] : memref<800x32xf32, #tpu.memory_space<vmem>>, vector<32x32xf32>
    %cst_104 = arith.constant dense<0.000000e+00> : vector<32x32xf32>
    %290 = tpu.matmul %288, %289, %cst_104 {dimension_numbers = #tpu.dot_dimension_numbers<[1], [0], [0], [1], [0, 0, 1, 1], [], []>} : vector<32x32xf32>, vector<32x32xf32>, vector<32x32xf32> -> vector<32x32xf32>
    %c728 = arith.constant 728 : index
    %c0_105 = arith.constant 0 : index
    %291 = vector.load %arg2[%c728, %c0_105] : memref<800x32xf32, #tpu.memory_space<vmem>>, vector<1x32xf32>
    %292 = vector.broadcast %291 : vector<1x32xf32> to vector<32x32xf32>
    %293 = arith.addf %290, %292 : vector<32x32xf32>
    %cst_106 = arith.constant dense<0.000000e+00> : vector<32x32xf32>
    %294 = tpu.matmul %229, %288, %cst_106 {dimension_numbers = #tpu.dot_dimension_numbers<[1], [0], [0], [1], [0, 0, 1, 1], [], []>} : vector<32x32xf32>, vector<32x32xf32>, vector<32x32xf32> -> vector<32x32xf32>
    %c552 = arith.constant 552 : index
    %c0_107 = arith.constant 0 : index
    %295 = vector.load %arg2[%c552, %c0_107] : memref<800x32xf32, #tpu.memory_space<vmem>>, vector<32x32xf32>
    %cst_108 = arith.constant dense<0.000000e+00> : vector<32x32xf32>
    %296 = tpu.matmul %294, %295, %cst_108 {dimension_numbers = #tpu.dot_dimension_numbers<[1], [0], [0], [1], [0, 0, 1, 1], [], []>} : vector<32x32xf32>, vector<32x32xf32>, vector<32x32xf32> -> vector<32x32xf32>
    %297 = arith.addf %293, %296 : vector<32x32xf32>
    %cst_109 = arith.constant dense<0.000000e+00> : vector<32x32xf32>
    %298 = tpu.matmul %234, %288, %cst_109 {dimension_numbers = #tpu.dot_dimension_numbers<[1], [0], [0], [1], [0, 0, 1, 1], [], []>} : vector<32x32xf32>, vector<32x32xf32>, vector<32x32xf32> -> vector<32x32xf32>
    %c584 = arith.constant 584 : index
    %c0_110 = arith.constant 0 : index
    %299 = vector.load %arg2[%c584, %c0_110] : memref<800x32xf32, #tpu.memory_space<vmem>>, vector<32x32xf32>
    %cst_111 = arith.constant dense<0.000000e+00> : vector<32x32xf32>
    %300 = tpu.matmul %298, %299, %cst_111 {dimension_numbers = #tpu.dot_dimension_numbers<[1], [0], [0], [1], [0, 0, 1, 1], [], []>} : vector<32x32xf32>, vector<32x32xf32>, vector<32x32xf32> -> vector<32x32xf32>
    %301 = arith.addf %297, %300 : vector<32x32xf32>
    %cst_112 = arith.constant 0.000000e+00 : f32
    %302 = vector.broadcast %cst_112 : f32 to vector<32x32xf32>
    %303 = arith.maximumf %301, %302 : vector<32x32xf32>
    %cst_113 = arith.constant dense<0.000000e+00> : vector<32x32xf32>
    %304 = tpu.matmul %254, %303, %cst_113 {dimension_numbers = #tpu.dot_dimension_numbers<[1], [0], [0], [1], [0, 0, 1, 1], [], []>} : vector<32x32xf32>, vector<32x32xf32>, vector<32x32xf32> -> vector<32x32xf32>
    %c752 = arith.constant 752 : index
    %c0_114 = arith.constant 0 : index
    %305 = vector.load %arg2[%c752, %c0_114] : memref<800x32xf32, #tpu.memory_space<vmem>>, vector<1x32xf32>
    %c776 = arith.constant 776 : index
    %c0_115 = arith.constant 0 : index
    %306 = vector.load %arg2[%c776, %c0_115] : memref<800x32xf32, #tpu.memory_space<vmem>>, vector<1x32xf32>
    %cst_116 = arith.constant dense<0.000000e+00> : vector<1x32xf32>
    %307 = tpu.matmul %0, %304, %cst_116 {dimension_numbers = #tpu.dot_dimension_numbers<[1], [0], [0], [1], [0, 0, 1, 1], [], []>} : vector<1x32xf32>, vector<32x32xf32>, vector<1x32xf32> -> vector<1x32xf32>
    %308 = arith.mulf %304, %304 : vector<32x32xf32>
    %cst_117 = arith.constant dense<0.000000e+00> : vector<1x32xf32>
    %309 = tpu.matmul %0, %308, %cst_117 {dimension_numbers = #tpu.dot_dimension_numbers<[1], [0], [0], [1], [0, 0, 1, 1], [], []>} : vector<1x32xf32>, vector<32x32xf32>, vector<1x32xf32> -> vector<1x32xf32>
    %cst_118 = arith.constant 3.125000e-02 : f32
    %310 = vector.broadcast %cst_118 : f32 to vector<1x32xf32>
    %311 = arith.mulf %307, %310 : vector<1x32xf32>
    %cst_119 = arith.constant 3.125000e-02 : f32
    %312 = vector.broadcast %cst_119 : f32 to vector<1x32xf32>
    %313 = arith.mulf %309, %312 : vector<1x32xf32>
    %314 = arith.mulf %311, %311 : vector<1x32xf32>
    %315 = arith.subf %313, %314 : vector<1x32xf32>
    %cst_120 = arith.constant 0.000000e+00 : f32
    %316 = vector.broadcast %cst_120 : f32 to vector<1x32xf32>
    %317 = arith.maximumf %315, %316 : vector<1x32xf32>
    %cst_121 = arith.constant 9.99999974E-6 : f32
    %318 = vector.broadcast %cst_121 : f32 to vector<1x32xf32>
    %319 = arith.addf %317, %318 : vector<1x32xf32>
    %320 = math.rsqrt %319 : vector<1x32xf32>
    %321 = vector.broadcast %311 : vector<1x32xf32> to vector<32x32xf32>
    %322 = arith.subf %304, %321 : vector<32x32xf32>
    %323 = arith.mulf %320, %305 : vector<1x32xf32>
    %324 = vector.broadcast %323 : vector<1x32xf32> to vector<32x32xf32>
    %325 = arith.mulf %322, %324 : vector<32x32xf32>
    %326 = vector.broadcast %306 : vector<1x32xf32> to vector<32x32xf32>
    %327 = arith.addf %325, %326 : vector<32x32xf32>
    %328 = arith.addf %224, %327 : vector<32x32xf32>
    %c616 = arith.constant 616 : index
    %c0_122 = arith.constant 0 : index
    %329 = vector.load %arg2[%c616, %c0_122] : memref<800x32xf32, #tpu.memory_space<vmem>>, vector<32x32xf32>
    %cst_123 = arith.constant dense<0.000000e+00> : vector<32x32xf32>
    %330 = tpu.matmul %328, %329, %cst_123 {dimension_numbers = #tpu.dot_dimension_numbers<[1], [0], [0], [1], [0, 0, 1, 1], [], []>} : vector<32x32xf32>, vector<32x32xf32>, vector<32x32xf32> -> vector<32x32xf32>
    %c784 = arith.constant 784 : index
    %c0_124 = arith.constant 0 : index
    %331 = vector.load %arg2[%c784, %c0_124] : memref<800x32xf32, #tpu.memory_space<vmem>>, vector<1x32xf32>
    %332 = vector.broadcast %331 : vector<1x32xf32> to vector<32x32xf32>
    %333 = arith.addf %330, %332 : vector<32x32xf32>
    %334 = arith.addf %333, %16 : vector<32x32xf32>
    %cst_125 = arith.constant 0.000000e+00 : f32
    %335 = vector.broadcast %cst_125 : f32 to vector<32x32xf32>
    %336 = arith.maximumf %334, %335 : vector<32x32xf32>
    %cst_126 = arith.constant dense<0.000000e+00> : vector<1x32xf32>
    %337 = tpu.matmul %0, %336, %cst_126 {dimension_numbers = #tpu.dot_dimension_numbers<[1], [0], [0], [1], [0, 0, 1, 1], [], []>} : vector<1x32xf32>, vector<32x32xf32>, vector<1x32xf32> -> vector<1x32xf32>
    %338 = arith.mulf %336, %336 : vector<32x32xf32>
    %cst_127 = arith.constant dense<0.000000e+00> : vector<1x32xf32>
    %339 = tpu.matmul %0, %338, %cst_127 {dimension_numbers = #tpu.dot_dimension_numbers<[1], [0], [0], [1], [0, 0, 1, 1], [], []>} : vector<1x32xf32>, vector<32x32xf32>, vector<1x32xf32> -> vector<1x32xf32>
    %cst_128 = arith.constant 3.125000e-02 : f32
    %340 = vector.broadcast %cst_128 : f32 to vector<1x32xf32>
    %341 = arith.mulf %337, %340 : vector<1x32xf32>
    %cst_129 = arith.constant 3.125000e-02 : f32
    %342 = vector.broadcast %cst_129 : f32 to vector<1x32xf32>
    %343 = arith.mulf %339, %342 : vector<1x32xf32>
    %344 = arith.mulf %341, %341 : vector<1x32xf32>
    %345 = arith.subf %343, %344 : vector<1x32xf32>
    %cst_130 = arith.constant 0.000000e+00 : f32
    %346 = vector.broadcast %cst_130 : f32 to vector<1x32xf32>
    %347 = arith.maximumf %345, %346 : vector<1x32xf32>
    %cst_131 = arith.constant 9.99999974E-6 : f32
    %348 = vector.broadcast %cst_131 : f32 to vector<1x32xf32>
    %349 = arith.addf %347, %348 : vector<1x32xf32>
    %350 = math.rsqrt %349 : vector<1x32xf32>
    %351 = vector.broadcast %341 : vector<1x32xf32> to vector<32x32xf32>
    %352 = arith.subf %336, %351 : vector<32x32xf32>
    %353 = vector.broadcast %350 : vector<1x32xf32> to vector<32x32xf32>
    %354 = arith.mulf %352, %353 : vector<32x32xf32>
    %c648 = arith.constant 648 : index
    %c0_132 = arith.constant 0 : index
    %355 = vector.load %arg2[%c648, %c0_132] : memref<800x32xf32, #tpu.memory_space<vmem>>, vector<32x32xf32>
    %cst_133 = arith.constant dense<0.000000e+00> : vector<32x32xf32>
    %356 = tpu.matmul %354, %355, %cst_133 {dimension_numbers = #tpu.dot_dimension_numbers<[1], [0], [0], [1], [0, 0, 1, 1], [], []>} : vector<32x32xf32>, vector<32x32xf32>, vector<32x32xf32> -> vector<32x32xf32>
    %c792 = arith.constant 792 : index
    %c0_134 = arith.constant 0 : index
    %357 = vector.load %arg2[%c792, %c0_134] : memref<800x32xf32, #tpu.memory_space<vmem>>, vector<1x32xf32>
    %358 = vector.broadcast %357 : vector<1x32xf32> to vector<32x32xf32>
    %359 = arith.addf %356, %358 : vector<32x32xf32>
    %c0_135 = arith.constant 0 : index
    %c0_136 = arith.constant 0 : index
    %360 = vector.load %arg3[%c0_135, %c0_136] : memref<32x32xf32, #tpu.memory_space<vmem>>, vector<32x32xf32>
    tpu.vector_store %arg3[%c0_135, %c0_136], %359 {strides = array<i32>} : memref<32x32xf32, #tpu.memory_space<vmem>>, vector<32x32xf32>,
    return
  }
  func.func @transform_0(%arg0: i32) -> (i32, i32) {
    %c0_i32 = arith.constant 0 : i32
    %c0_i32_0 = arith.constant 0 : i32
    %c0_i32_1 = arith.constant 0 : i32
    return %c0_i32, %c0_i32_0 : i32, i32
  }
  func.func @transform_1(%arg0: i32) -> (i32, i32) {
    %c0_i32 = arith.constant 0 : i32
    %c0_i32_0 = arith.constant 0 : i32
    %c0_i32_1 = arith.constant 0 : i32
    return %c0_i32, %c0_i32_0 : i32, i32
  }
  func.func @transform_2(%arg0: i32) -> (i32, i32) {
    %c0_i32 = arith.constant 0 : i32
    %c0_i32_0 = arith.constant 0 : i32
    %c0_i32_1 = arith.constant 0 : i32
    return %c0_i32, %c0_i32_0 : i32, i32
  }
}

</mosaic_0001>

<llo_original>
// kernel: text_encoder_forward.1
$region0: #{text_encoder_forward.1}
  #allocation0 [shape = 'u32[]', space=smem, size = 0x4, offset = 0x4, fixed_abs, tag = 'smem constant byte address 0x4 - core index']
  #allocation1 [shape = 'u32[72,128]{1,0:T(1,128)}', space=vmem, size = 0x9000, scoped, tag = 'internal scratch']
  %s0 = inlined_call_operand.vmem [shape: s32[32,1], index: 0, kind: input, shape index: {}]
  %s1 = inlined_call_operand.vmem [shape: f32[800,32], index: 1, kind: input, shape index: {}]
  %s2 = inlined_call_operand.hbm [shape: f32[32,32], index: 2, kind: output, shape index: {}]
  %s3 = sld [smem:[#allocation0]]
  $region18: #{text_encoder_forward.1} parent=0
    _
  %s5 = ssub.s32 1, %s3
  %s6 = scalar_select 0, %s5, %s3
  $region1: #{text_encoder_forward.1} parent=0
    #allocation2 [shape = 'u8[16384]{0}', space=vmem, size = 0x4000, scoped, tag = 'output window, operand 0, single buffered']
    #allocation3 [shape = 's32[1]{0}', space=sflag, size = 0x4, scoped, tag = 'scoped memory for text_encoder_forward.1']
    %7 = vsyncpa [#allocation3], 0
    // Predicated region
    $region2: #{text_encoder_forward.1} parent=1 // pred_check
      _
    $region3: #{text_encoder_forward.1} parent=1 // pred_check_branch
      %9 = sbr.rel (0) target = $region5
    $region4: #{text_encoder_forward.1} parent=1 // pred_region
      _
    $region5: #{text_encoder_forward.1} parent=1 // pred_fallthru
      _
    // Predicated region
    $region6: #{text_encoder_forward.1} parent=1 // pred_check
      _
    $region7: #{text_encoder_forward.1} parent=1 // pred_check_branch
      %11 = sbr.rel (0) target = $region9
    $region8: #{text_encoder_forward.1} parent=1 // pred_region
      _
    $region9: #{text_encoder_forward.1} parent=1 // pred_fallthru
      _
    %v12 = vlaneseq
    %v13 = vshrl.u32 %v12, 7
    %v14 = vadd.s32 %v13, 8
    %v15 = vadd.s32 %v13, 16
    %v16 = vadd.s32 %v13, 24
    %v17 = vlaneseq
    %v18 = vand.u32 %v17, 127
    %v19 = vld [vmem:[%s0] sm:$0xff]
    %v20 = vld [vmem:[%s0 + $0x8] sm:$0xff]
    %v21 = vld [vmem:[%s0 + $0x10] sm:$0xff]
    %v22 = vld [vmem:[%s0 + $0x18] sm:$0xff]
    %23 = vset.pattern.permute.xlu0 0
    %24 = vperm.xlu0 %23, %v19
    %v25 = vpop.permute.xlu0 %24
    %26 = vset.pattern.permute.xlu0 0
    %27 = vperm.xlu0 %26, %v20
    %v28 = vpop.permute.xlu0 %27
    %29 = vset.pattern.permute.xlu0 0
    %30 = vperm.xlu0 %29, %v21
    %v31 = vpop.permute.xlu0 %30
    %32 = vset.pattern.permute.xlu0 0
    %33 = vperm.xlu0 %32, %v22
    %v34 = vpop.permute.xlu0 %33
    %vm35 = vcmp.eq.s32.totalorder %v25, %v18
    %vm36 = vcmp.eq.s32.totalorder %v28, %v18
    %vm37 = vcmp.eq.s32.totalorder %v31, %v18
    %vm38 = vcmp.eq.s32.totalorder %v34, %v18
    %v39 = vsel %vm35, 1, 0
    %v40 = vsel %vm36, 1, 0
    %v41 = vsel %vm37, 1, 0
    %v42 = vsel %vm38, 1, 0
    %v43 = vcvt.s32.f32 %v39
    %v44 = vcvt.s32.f32 %v40
    %v45 = vcvt.s32.f32 %v41
    %v46 = vcvt.s32.f32 %v42
    %v47 = vld [vmem:[%s1] sm:$0xff]
    %v48 = vld [vmem:[%s1 + $0x8] sm:$0xff]
    %v49 = vld [vmem:[%s1 + $0x10] sm:$0xff]
    %v50 = vld [vmem:[%s1 + $0x18] sm:$0xff]
    %v51 = vld [vmem:[%s1 + $0x20] sm:$0xff]
    %v52 = vld [vmem:[%s1 + $0x2a8] sm:$0x1]
    %v53 = vperm.slane %v52, 0
    %vm54 = vcmask 326656
    %v56 = vsel %vm54, %v43, 0
    %v59 = vsel %vm54, %v44, 0
    %v62 = vsel %vm54, %v45, 0
    %v65 = vsel %vm54, %v46, 0
    %67 = vmatpush.msra.mxu0 0.0
    %68 = vmatpush.msra.mxu0 0.0
    %69 = vmatpush.msra.mxu0 0.0
    %70 = vmatpush.msra.mxu0 0.0
    %71 = vmatpush.msra.mxu0 0.0
    %72 = vmatpush.msra.mxu0 0.0
    %73 = vmatpush.msra.mxu0 0.0
    %74 = vmatpush.msra.mxu0 0.0
    %75 = vmatpush.msra.mxu0 0.0
    %76 = vmatpush.msra.mxu0 0.0
    %77 = vmatpush.msra.mxu0 0.0
    %78 = vmatpush.msra.mxu0 %v51
    %79 = vmatpush.msra.mxu0 %v50
    %80 = vmatpush.msra.mxu0 %v49
    %81 = vmatpush.msra.mxu0 %v48
    %82 = vmatpush.msra.mxu0 %v47
    %83 = vmatmul.f32.gmra.mxu0 %v56
    %v84 = vpop.f32.mrf.mxu0
    %v85 = vadd.f32 %v53, %v84
    %86 = vmatmul.f32.gmra.mxu0 %v59
    %v87 = vpop.f32.mrf.mxu0
    %v88 = vadd.f32 %v53, %v87
    %89 = vmatmul.f32.gmra.mxu0 %v62
    %v90 = vpop.f32.mrf.mxu0
    %v91 = vadd.f32 %v53, %v90
    %92 = vmatmul.f32.gmra.mxu0 %v65
    %v93 = vpop.f32.mrf.mxu0
    %v94 = vadd.f32 %v53, %v93
    %95 = vdwg.mxu0
    %v96 = vmax.f32 %v85, 0.0
    %v97 = vmax.f32 %v88, 0.0
    %v98 = vmax.f32 %v91, 0.0
    %v99 = vmax.f32 %v94, 0.0
    %v100 = vadd.s32 %v13, 1
    %v101 = vadd.s32 %v14, 1
    %v102 = vadd.s32 %v15, 1
    %v103 = vadd.s32 %v16, 1
    %vm104 = vcmp.eq.s32.totalorder %v18, %v100
    %vm105 = vcmp.eq.s32.totalorder %v18, %v101
    %vm106 = vcmp.eq.s32.totalorder %v18, %v102
    %vm107 = vcmp.eq.s32.totalorder %v18, %v103
    %v108 = vsel %vm104, 1, 0
    %v109 = vsel %vm105, 1, 0
    %v110 = vsel %vm106, 1, 0
    %v111 = vsel %vm107, 1, 0
    %v112 = vcvt.s32.f32 %v108
    %v113 = vcvt.s32.f32 %v109
    %v114 = vcvt.s32.f32 %v110
    %v115 = vcvt.s32.f32 %v111
    %v116 = vadd.s32 %v13, 2
    %v117 = vadd.s32 %v14, 2
    %v118 = vadd.s32 %v15, 2
    %v119 = vadd.s32 %v16, 2
    %vm120 = vcmp.eq.s32.totalorder %v18, %v116
    %vm121 = vcmp.eq.s32.totalorder %v18, %v117
    %vm122 = vcmp.eq.s32.totalorder %v18, %v118
    %vm123 = vcmp.eq.s32.totalorder %v18, %v119
    %v124 = vsel %vm120, 1, 0
    %v125 = vsel %vm121, 1, 0
    %v126 = vsel %vm122, 1, 0
    %v127 = vsel %vm123, 1, 0
    %v128 = vcvt.s32.f32 %v124
    %v129 = vcvt.s32.f32 %v125
    %v130 = vcvt.s32.f32 %v126
    %v131 = vcvt.s32.f32 %v127
    %vm132 = vcmp.ge.s32.totalorder %v13, 1
    %vm133 = vcmp.ge.s32.totalorder %v14, 1
    %vm134 = vcmp.ge.s32.totalorder %v15, 1
    %vm135 = vcmp.ge.s32.totalorder %v16, 1
    %vm136 = vcmp.lt.s32.totalorder %v13, 15
    %vm137 = vcmp.lt.s32.totalorder %v14, 15
    %vm138 = vcmp.lt.s32.totalorder %v15, 15
    %vm139 = vcmp.lt.s32.totalorder %v16, 15
    %vm140 = vmand %vm132, %vm136
    %vm141 = vmand %vm133, %vm137
    %vm142 = vmand %vm134, %vm138
    %vm143 = vmand %vm135, %vm139
    %vm144 = vcmp.ge.s32.totalorder %v13, 17
    %vm145 = vcmp.ge.s32.totalorder %v14, 17
    %vm146 = vcmp.ge.s32.totalorder %v15, 17
    %vm147 = vcmp.ge.s32.totalorder %v16, 17
    %vm148 = vcmp.lt.s32.totalorder %v13, 31
    %vm149 = vcmp.lt.s32.totalorder %v14, 31
    %vm150 = vcmp.lt.s32.totalorder %v15, 31
    %vm151 = vcmp.lt.s32.totalorder %v16, 31
    %vm152 = vmand %vm144, %vm148
    %vm153 = vmand %vm145, %vm149
    %vm154 = vmand %vm146, %vm150
    %vm155 = vmand %vm147, %vm151
    %vm156 = vmor %vm140, %vm152
    %vm157 = vmor %vm141, %vm153
    %vm158 = vmor %vm142, %vm154
    %vm159 = vmor %vm143, %vm155
    %v160 = vsub.s32 %v13, 1
    %v161 = vsub.s32 %v14, 1
    %v162 = vsub.s32 %v15, 1
    %v163 = vsub.s32 %v16, 1
    %vm164 = vcmp.eq.s32.totalorder %v18, %v160
    %vm165 = vcmp.eq.s32.totalorder %v18, %v161
    %vm166 = vcmp.eq.s32.totalorder %v18, %v162
    %vm167 = vcmp.eq.s32.totalorder %v18, %v163
    %v168 = vsel %vm164, 1, 0
    %v169 = vsel %vm165, 1, 0
    %v170 = vsel %vm166, 1, 0
    %v171 = vsel %vm167, 1, 0
    %v172 = vcvt.s32.f32 %v168
    %v173 = vcvt.s32.f32 %v169
    %v174 = vcvt.s32.f32 %v170
    %v175 = vcvt.s32.f32 %v171
    %v176 = vsel %vm156, 1, 0
    %v177 = vsel %vm157, 1, 0
    %v178 = vsel %vm158, 1, 0
    %v179 = vsel %vm159, 1, 0
    %v180 = vcvt.s32.f32 %v176
    %v181 = vcvt.s32.f32 %v177
    %v182 = vcvt.s32.f32 %v178
    %v183 = vcvt.s32.f32 %v179
    %v184 = vmul.f32 %v172, %v180
    %v185 = vmul.f32 %v173, %v181
    %v186 = vmul.f32 %v174, %v182
    %v187 = vmul.f32 %v175, %v183
    %v188 = vld [vmem:[%s1 + $0x28] sm:$0xff]
    %v189 = vld [vmem:[%s1 + $0x30] sm:$0xff]
    %v190 = vld [vmem:[%s1 + $0x38] sm:$0xff]
    %v191 = vld [vmem:[%s1 + $0x40] sm:$0xff]
    %v192 = vld [vmem:[%s1 + $0x2b0] sm:$0x1]
    %v193 = vperm.slane %v192, 0
    %vm194 = vcmask 261120
    %v196 = vsel %vm194, %v96, 0
    %v199 = vsel %vm194, %v97, 0
    %v202 = vsel %vm194, %v98, 0
    %v205 = vsel %vm194, %v99, 0
    %207 = vmatpush.msra.mxu0 0.0
    %208 = vmatpush.msra.mxu0 0.0
    %209 = vmatpush.msra.mxu0 0.0
    %210 = vmatpush.msra.mxu0 0.0
    %211 = vmatpush.msra.mxu0 0.0
    %212 = vmatpush.msra.mxu0 0.0
    %213 = vmatpush.msra.mxu0 0.0
    %214 = vmatpush.msra.mxu0 0.0
    %215 = vmatpush.msra.mxu0 0.0
    %216 = vmatpush.msra.mxu0 0.0
    %217 = vmatpush.msra.mxu0 0.0
    %218 = vmatpush.msra.mxu0 0.0
    %219 = vmatpush.msra.mxu0 %v191
    %220 = vmatpush.msra.mxu0 %v190
    %221 = vmatpush.msra.mxu0 %v189
    %222 = vmatpush.msra.mxu0 %v188
    %223 = vmatmul.f32.gmra.mxu0 %v196
    %v224 = vpop.f32.mrf.mxu0
    %v225 = vadd.f32 %v193, %v224
    %226 = vmatmul.f32.gmra.mxu0 %v199
    %v227 = vpop.f32.mrf.mxu0
    %v228 = vadd.f32 %v193, %v227
    %229 = vmatmul.f32.gmra.mxu0 %v202
    %v230 = vpop.f32.mrf.mxu0
    %v231 = vadd.f32 %v193, %v230
    %232 = vmatmul.f32.gmra.mxu0 %v205
    %v233 = vpop.f32.mrf.mxu0
    %v234 = vadd.f32 %v193, %v233
    %235 = vdwg.mxu0
    %v237 = vsel %vm194, %v112, 0
    %v240 = vsel %vm194, %v113, 0
    %v243 = vsel %vm194, %v114, 0
    %v246 = vsel %vm194, %v115, 0
    %248 = vmatpush.msra.mxu0 0.0
    %249 = vmatpush.msra.mxu0 0.0
    %250 = vmatpush.msra.mxu0 0.0
    %251 = vmatpush.msra.mxu0 0.0
    %252 = vmatpush.msra.mxu0 0.0
    %253 = vmatpush.msra.mxu0 0.0
    %254 = vmatpush.msra.mxu0 0.0
    %255 = vmatpush.msra.mxu0 0.0
    %256 = vmatpush.msra.mxu0 0.0
    %257 = vmatpush.msra.mxu0 0.0
    %258 = vmatpush.msra.mxu0 0.0
    %259 = vmatpush.msra.mxu0 0.0
    %260 = vmatpush.msra.mxu0 %v99
    %261 = vmatpush.msra.mxu0 %v98
    %262 = vmatpush.msra.mxu0 %v97
    %263 = vmatpush.msra.mxu0 %v96
    %264 = vmatmul.f32.gmra.mxu0 %v237
    %v265 = vpop.f32.mrf.mxu0
    %v266 = vadd.f32 0.0, %v265
    %267 = vmatmul.f32.gmra.mxu0 %v240
    %v268 = vpop.f32.mrf.mxu0
    %v269 = vadd.f32 0.0, %v268
    %270 = vmatmul.f32.gmra.mxu0 %v243
    %v271 = vpop.f32.mrf.mxu0
    %v272 = vadd.f32 0.0, %v271
    %273 = vmatmul.f32.gmra.mxu0 %v246
    %v274 = vpop.f32.mrf.mxu0
    %v275 = vadd.f32 0.0, %v274
    %276 = vdwg.mxu0
    %v277 = vld [vmem:[%s1 + $0x48] sm:$0xff]
    %v278 = vld [vmem:[%s1 + $0x50] sm:$0xff]
    %v279 = vld [vmem:[%s1 + $0x58] sm:$0xff]
    %v280 = vld [vmem:[%s1 + $0x60] sm:$0xff]
    %v282 = vsel %vm194, %v266, 0
    %v285 = vsel %vm194, %v269, 0
    %v288 = vsel %vm194, %v272, 0
    %v291 = vsel %vm194, %v275, 0
    %293 = vmatpush.msra.mxu0 0.0
    %294 = vmatpush.msra.mxu0 0.0
    %295 = vmatpush.msra.mxu0 0.0
    %296 = vmatpush.msra.mxu0 0.0
    %297 = vmatpush.msra.mxu0 0.0
    %298 = vmatpush.msra.mxu0 0.0
    %299 = vmatpush.msra.mxu0 0.0
    %300 = vmatpush.msra.mxu0 0.0
    %301 = vmatpush.msra.mxu0 0.0
    %302 = vmatpush.msra.mxu0 0.0
    %303 = vmatpush.msra.mxu0 0.0
    %304 = vmatpush.msra.mxu0 0.0
    %305 = vmatpush.msra.mxu0 %v280
    %306 = vmatpush.msra.mxu0 %v279
    %307 = vmatpush.msra.mxu0 %v278
    %308 = vmatpush.msra.mxu0 %v277
    %309 = vmatmul.f32.gmra.mxu0 %v282
    %v310 = vpop.f32.mrf.mxu0
    %v311 = vadd.f32 0.0, %v310
    %312 = vmatmul.f32.gmra.mxu0 %v285
    %v313 = vpop.f32.mrf.mxu0
    %v314 = vadd.f32 0.0, %v313
    %315 = vmatmul.f32.gmra.mxu0 %v288
    %v316 = vpop.f32.mrf.mxu0
    %v317 = vadd.f32 0.0, %v316
    %318 = vmatmul.f32.gmra.mxu0 %v291
    %v319 = vpop.f32.mrf.mxu0
    %v320 = vadd.f32 0.0, %v319
    %321 = vdwg.mxu0
    %v322 = vadd.f32 %v225, %v311
    %v323 = vadd.f32 %v228, %v314
    %v324 = vadd.f32 %v231, %v317
    %v325 = vadd.f32 %v234, %v320
    %v327 = vsel %vm194, %v128, 0
    %v330 = vsel %vm194, %v129, 0
    %v333 = vsel %vm194, %v130, 0
    %v336 = vsel %vm194, %v131, 0
    %338 = vmatpush.msra.mxu0 0.0
    %339 = vmatpush.msra.mxu0 0.0
    %340 = vmatpush.msra.mxu0 0.0
    %341 = vmatpush.msra.mxu0 0.0
    %342 = vmatpush.msra.mxu0 0.0
    %343 = vmatpush.msra.mxu0 0.0
    %344 = vmatpush.msra.mxu0 0.0
    %345 = vmatpush.msra.mxu0 0.0
    %346 = vmatpush.msra.mxu0 0.0
    %347 = vmatpush.msra.mxu0 0.0
    %348 = vmatpush.msra.mxu0 0.0
    %349 = vmatpush.msra.mxu0 0.0
    %350 = vmatpush.msra.mxu0 %v99
    %351 = vmatpush.msra.mxu0 %v98
    %352 = vmatpush.msra.mxu0 %v97
    %353 = vmatpush.msra.mxu0 %v96
    %354 = vmatmul.f32.gmra.mxu0 %v327
    %v355 = vpop.f32.mrf.mxu0
    %v356 = vadd.f32 0.0, %v355
    %357 = vmatmul.f32.gmra.mxu0 %v330
    %v358 = vpop.f32.mrf.mxu0
    %v359 = vadd.f32 0.0, %v358
    %360 = vmatmul.f32.gmra.mxu0 %v333
    %v361 = vpop.f32.mrf.mxu0
    %v362 = vadd.f32 0.0, %v361
    %363 = vmatmul.f32.gmra.mxu0 %v336
    %v364 = vpop.f32.mrf.mxu0
    %v365 = vadd.f32 0.0, %v364
    %366 = vdwg.mxu0
    %v367 = vld [vmem:[%s1 + $0x68] sm:$0xff]
    %v368 = vld [vmem:[%s1 + $0x70] sm:$0xff]
    %v369 = vld [vmem:[%s1 + $0x78] sm:$0xff]
    %v370 = vld [vmem:[%s1 + $0x80] sm:$0xff]
    %v372 = vsel %vm194, %v356, 0
    %v375 = vsel %vm194, %v359, 0
    %v378 = vsel %vm194, %v362, 0
    %v381 = vsel %vm194, %v365, 0
    %383 = vmatpush.msra.mxu0 0.0
    %384 = vmatpush.msra.mxu0 0.0
    %385 = vmatpush.msra.mxu0 0.0
    %386 = vmatpush.msra.mxu0 0.0
    %387 = vmatpush.msra.mxu0 0.0
    %388 = vmatpush.msra.mxu0 0.0
    %389 = vmatpush.msra.mxu0 0.0
    %390 = vmatpush.msra.mxu0 0.0
    %391 = vmatpush.msra.mxu0 0.0
    %392 = vmatpush.msra.mxu0 0.0
    %393 = vmatpush.msra.mxu0 0.0
    %394 = vmatpush.msra.mxu0 0.0
    %395 = vmatpush.msra.mxu0 %v370
    %396 = vmatpush.msra.mxu0 %v369
    %397 = vmatpush.msra.mxu0 %v368
    %398 = vmatpush.msra.mxu0 %v367
    %399 = vmatmul.f32.gmra.mxu0 %v372
    %v400 = vpop.f32.mrf.mxu0
    %v401 = vadd.f32 0.0, %v400
    %402 = vmatmul.f32.gmra.mxu0 %v375
    %v403 = vpop.f32.mrf.mxu0
    %v404 = vadd.f32 0.0, %v403
    %405 = vmatmul.f32.gmra.mxu0 %v378
    %v406 = vpop.f32.mrf.mxu0
    %v407 = vadd.f32 0.0, %v406
    %408 = vmatmul.f32.gmra.mxu0 %v381
    %v409 = vpop.f32.mrf.mxu0
    %v410 = vadd.f32 0.0, %v409
    %411 = vdwg.mxu0
    %v412 = vadd.f32 %v322, %v401
    %v413 = vadd.f32 %v323, %v404
    %v414 = vadd.f32 %v324, %v407
    %v415 = vadd.f32 %v325, %v410
    %v416 = vmax.f32 %v412, 0.0
    %v417 = vmax.f32 %v413, 0.0
    %v418 = vmax.f32 %v414, 0.0
    %v419 = vmax.f32 %v415, 0.0
    %v421 = vsel %vm194, %v184, 0
    %v424 = vsel %vm194, %v185, 0
    %v427 = vsel %vm194, %v186, 0
    %v430 = vsel %vm194, %v187, 0
    %432 = vmatpush.msra.mxu0 0.0
    %433 = vmatpush.msra.mxu0 0.0
    %434 = vmatpush.msra.mxu0 0.0
    %435 = vmatpush.msra.mxu0 0.0
    %436 = vmatpush.msra.mxu0 0.0
    %437 = vmatpush.msra.mxu0 0.0
    %438 = vmatpush.msra.mxu0 0.0
    %439 = vmatpush.msra.mxu0 0.0
    %440 = vmatpush.msra.mxu0 0.0
    %441 = vmatpush.msra.mxu0 0.0
    %442 = vmatpush.msra.mxu0 0.0
    %443 = vmatpush.msra.mxu0 0.0
    %444 = vmatpush.msra.mxu0 %v419
    %445 = vmatpush.msra.mxu0 %v418
    %446 = vmatpush.msra.mxu0 %v417
    %447 = vmatpush.msra.mxu0 %v416
    %448 = vmatmul.f32.gmra.mxu0 %v421
    %v449 = vpop.f32.mrf.mxu0
    %v450 = vadd.f32 0.0, %v449
    %451 = vmatmul.f32.gmra.mxu0 %v424
    %v452 = vpop.f32.mrf.mxu0
    %v453 = vadd.f32 0.0, %v452
    %454 = vmatmul.f32.gmra.mxu0 %v427
    %v455 = vpop.f32.mrf.mxu0
    %v456 = vadd.f32 0.0, %v455
    %457 = vmatmul.f32.gmra.mxu0 %v430
    %v458 = vpop.f32.mrf.mxu0
    %v459 = vadd.f32 0.0, %v458
    %460 = vdwg.mxu0
    %v462 = vsel %vm194, 1.0, 0
    %464 = vmatpush.msra.mxu0 0.0
    %465 = vmatpush.msra.mxu0 0.0
    %466 = vmatpush.msra.mxu0 0.0
    %467 = vmatpush.msra.mxu0 0.0
    %468 = vmatpush.msra.mxu0 0.0
    %469 = vmatpush.msra.mxu0 0.0
    %470 = vmatpush.msra.mxu0 0.0
    %471 = vmatpush.msra.mxu0 0.0
    %472 = vmatpush.msra.mxu0 0.0
    %473 = vmatpush.msra.mxu0 0.0
    %474 = vmatpush.msra.mxu0 0.0
    %475 = vmatpush.msra.mxu0 0.0
    %476 = vmatpush.msra.mxu0 %v459
    %477 = vmatpush.msra.mxu0 %v456
    %478 = vmatpush.msra.mxu0 %v453
    %479 = vmatpush.msra.mxu0 %v450
    %480 = vmatmul.f32.gmra.mxu0 %v462
    %v481 = vpop.f32.mrf.mxu0
    %v482 = vadd.f32 0.0, %v481
    %483 = vdwg.mxu0
    %v484 = vmul.f32 %v450, %v450
    %v485 = vmul.f32 %v453, %v453
    %v486 = vmul.f32 %v456, %v456
    %v487 = vmul.f32 %v459, %v459
    %488 = vmatpush.msra.mxu0 0.0
    %489 = vmatpush.msra.mxu0 0.0
    %490 = vmatpush.msra.mxu0 0.0
    %491 = vmatpush.msra.mxu0 0.0
    %492 = vmatpush.msra.mxu0 0.0
    %493 = vmatpush.msra.mxu0 0.0
    %494 = vmatpush.msra.mxu0 0.0
    %495 = vmatpush.msra.mxu0 0.0
    %496 = vmatpush.msra.mxu0 0.0
    %497 = vmatpush.msra.mxu0 0.0
    %498 = vmatpush.msra.mxu0 0.0
    %499 = vmatpush.msra.mxu0 0.0
    %500 = vmatpush.msra.mxu0 %v487
    %501 = vmatpush.msra.mxu0 %v486
    %502 = vmatpush.msra.mxu0 %v485
    %503 = vmatpush.msra.mxu0 %v484
    %504 = vmatmul.f32.gmra.mxu0 %v462
    %v505 = vpop.f32.mrf.mxu0
    %v506 = vadd.f32 0.0, %v505
    %507 = vdwg.mxu0
    %v508 = vmul.f32 %v482, 0.03125
    %v509 = vmul.f32 %v506, 0.03125
    %v510 = vmul.f32 %v508, %v508
    %v511 = vsub.f32 %v509, %v510
    %v512 = vmax.f32 %v511, 0.0
    %v513 = vadd.f32 %v512, 1e-05
    %v514 = vrsqrt.pop %v513
    %v515 = vmul.f32 %v514, %v513
    %v516 = vmul.f32 %v515, %v514
    %v517 = vmul.f32 0.5, %v516
    %v518 = vsub.f32 1.5, %v517
    %v519 = vmul.f32 %v514, %v518
    %vm520 = vweird.f32 %v513
    %vm521 = vweird.f32 %v514
    %vm522 = vmor %vm520, %vm521
    %v523 = vsel %vm522, %v514, %v519
    %v524 = vperm.slane %v508, 0
    %v525 = vsub.f32 %v450, %v524
    %v526 = vsub.f32 %v453, %v524
    %v527 = vsub.f32 %v456, %v524
    %v528 = vsub.f32 %v459, %v524
    %v529 = vperm.slane %v523, 0
    %v530 = vmul.f32 %v525, %v529
    %v531 = vmul.f32 %v526, %v529
    %v532 = vmul.f32 %v527, %v529
    %v533 = vmul.f32 %v528, %v529
    %v534 = vld [vmem:[%s1 + $0x88] sm:$0xff]
    %v535 = vld [vmem:[%s1 + $0x90] sm:$0xff]
    %v536 = vld [vmem:[%s1 + $0x98] sm:$0xff]
    %v537 = vld [vmem:[%s1 + $0xa0] sm:$0xff]
    %v538 = vld [vmem:[%s1 + $0x2b8] sm:$0x1]
    %v539 = vperm.slane %v538, 0
    %v541 = vsel %vm194, %v530, 0
    %v544 = vsel %vm194, %v531, 0
    %v547 = vsel %vm194, %v532, 0
    %v550 = vsel %vm194, %v533, 0
    %552 = vmatpush.msra.mxu0 0.0
    %553 = vmatpush.msra.mxu0 0.0
    %554 = vmatpush.msra.mxu0 0.0
    %555 = vmatpush.msra.mxu0 0.0
    %556 = vmatpush.msra.mxu0 0.0
    %557 = vmatpush.msra.mxu0 0.0
    %558 = vmatpush.msra.mxu0 0.0
    %559 = vmatpush.msra.mxu0 0.0
    %560 = vmatpush.msra.mxu0 0.0
    %561 = vmatpush.msra.mxu0 0.0
    %562 = vmatpush.msra.mxu0 0.0
    %563 = vmatpush.msra.mxu0 0.0
    %564 = vmatpush.msra.mxu0 %v537
    %565 = vmatpush.msra.mxu0 %v536
    %566 = vmatpush.msra.mxu0 %v535
    %567 = vmatpush.msra.mxu0 %v534
    %568 = vmatmul.f32.gmra.mxu0 %v541
    %v569 = vpop.f32.mrf.mxu0
    %v570 = vadd.f32 %v539, %v569
    %571 = vmatmul.f32.gmra.mxu0 %v544
    %v572 = vpop.f32.mrf.mxu0
    %v573 = vadd.f32 %v539, %v572
    %574 = vmatmul.f32.gmra.mxu0 %v547
    %v575 = vpop.f32.mrf.mxu0
    %v576 = vadd.f32 %v539, %v575
    %577 = vmatmul.f32.gmra.mxu0 %v550
    %v578 = vpop.f32.mrf.mxu0
    %v579 = vadd.f32 %v539, %v578
    %580 = vdwg.mxu0
    %581 = vmatpush.msra.mxu0 0.0
    %582 = vmatpush.msra.mxu0 0.0
    %583 = vmatpush.msra.mxu0 0.0
    %584 = vmatpush.msra.mxu0 0.0
    %585 = vmatpush.msra.mxu0 0.0
    %586 = vmatpush.msra.mxu0 0.0
    %587 = vmatpush.msra.mxu0 0.0
    %588 = vmatpush.msra.mxu0 0.0
    %589 = vmatpush.msra.mxu0 0.0
    %590 = vmatpush.msra.mxu0 0.0
    %591 = vmatpush.msra.mxu0 0.0
    %592 = vmatpush.msra.mxu0 0.0
    %593 = vmatpush.msra.mxu0 %v533
    %594 = vmatpush.msra.mxu0 %v532
    %595 = vmatpush.msra.mxu0 %v531
    %596 = vmatpush.msra.mxu0 %v530
    %597 = vmatmul.f32.gmra.mxu0 %v237
    %v598 = vpop.f32.mrf.mxu0
    %v599 = vadd.f32 0.0, %v598
    %600 = vmatmul.f32.gmra.mxu0 %v240
    %v601 = vpop.f32.mrf.mxu0
    %v602 = vadd.f32 0.0, %v601
    %603 = vmatmul.f32.gmra.mxu0 %v243
    %v604 = vpop.f32.mrf.mxu0
    %v605 = vadd.f32 0.0, %v604
    %606 = vmatmul.f32.gmra.mxu0 %v246
    %v607 = vpop.f32.mrf.mxu0
    %v608 = vadd.f32 0.0, %v607
    %609 = vdwg.mxu0
    %v610 = vld [vmem:[%s1 + $0xa8] sm:$0xff]
    %v611 = vld [vmem:[%s1 + $0xb0] sm:$0xff]
    %v612 = vld [vmem:[%s1 + $0xb8] sm:$0xff]
    %v613 = vld [vmem:[%s1 + $0xc0] sm:$0xff]
    %v615 = vsel %vm194, %v599, 0
    %v618 = vsel %vm194, %v602, 0
    %v621 = vsel %vm194, %v605, 0
    %v624 = vsel %vm194, %v608, 0
    %626 = vmatpush.msra.mxu0 0.0
    %627 = vmatpush.msra.mxu0 0.0
    %628 = vmatpush.msra.mxu0 0.0
    %629 = vmatpush.msra.mxu0 0.0
    %630 = vmatpush.msra.mxu0 0.0
    %631 = vmatpush.msra.mxu0 0.0
    %632 = vmatpush.msra.mxu0 0.0
    %633 = vmatpush.msra.mxu0 0.0
    %634 = vmatpush.msra.mxu0 0.0
    %635 = vmatpush.msra.mxu0 0.0
    %636 = vmatpush.msra.mxu0 0.0
    %637 = vmatpush.msra.mxu0 0.0
    %638 = vmatpush.msra.mxu0 %v613
    %639 = vmatpush.msra.mxu0 %v612
    %640 = vmatpush.msra.mxu0 %v611
    %641 = vmatpush.msra.mxu0 %v610
    %642 = vmatmul.f32.gmra.mxu0 %v615
    %v643 = vpop.f32.mrf.mxu0
    %v644 = vadd.f32 0.0, %v643
    %645 = vmatmul.f32.gmra.mxu0 %v618
    %v646 = vpop.f32.mrf.mxu0
    %v647 = vadd.f32 0.0, %v646
    %648 = vmatmul.f32.gmra.mxu0 %v621
    %v649 = vpop.f32.mrf.mxu0
    %v650 = vadd.f32 0.0, %v649
    %651 = vmatmul.f32.gmra.mxu0 %v624
    %v652 = vpop.f32.mrf.mxu0
    %v653 = vadd.f32 0.0, %v652
    %654 = vdwg.mxu0
    %v655 = vadd.f32 %v570, %v644
    %v656 = vadd.f32 %v573, %v647
    %v657 = vadd.f32 %v576, %v650
    %v658 = vadd.f32 %v579, %v653
    %659 = vmatpush.msra.mxu0 0.0
    %660 = vmatpush.msra.mxu0 0.0
    %661 = vmatpush.msra.mxu0 0.0
    %662 = vmatpush.msra.mxu0 0.0
    %663 = vmatpush.msra.mxu0 0.0
    %664 = vmatpush.msra.mxu0 0.0
    %665 = vmatpush.msra.mxu0 0.0
    %666 = vmatpush.msra.mxu0 0.0
    %667 = vmatpush.msra.mxu0 0.0
    %668 = vmatpush.msra.mxu0 0.0
    %669 = vmatpush.msra.mxu0 0.0
    %670 = vmatpush.msra.mxu0 0.0
    %671 = vmatpush.msra.mxu0 %v533
    %672 = vmatpush.msra.mxu0 %v532
    %673 = vmatpush.msra.mxu0 %v531
    %674 = vmatpush.msra.mxu0 %v530
    %675 = vmatmul.f32.gmra.mxu0 %v327
    %v676 = vpop.f32.mrf.mxu0
    %v677 = vadd.f32 0.0, %v676
    %678 = vmatmul.f32.gmra.mxu0 %v330
    %v679 = vpop.f32.mrf.mxu0
    %v680 = vadd.f32 0.0, %v679
    %681 = vmatmul.f32.gmra.mxu0 %v333
    %v682 = vpop.f32.mrf.mxu0
    %v683 = vadd.f32 0.0, %v682
    %684 = vmatmul.f32.gmra.mxu0 %v336
    %v685 = vpop.f32.mrf.mxu0
    %v686 = vadd.f32 0.0, %v685
    %687 = vdwg.mxu0
    %v688 = vld [vmem:[%s1 + $0xc8] sm:$0xff]
    %v689 = vld [vmem:[%s1 + $0xd0] sm:$0xff]
    %v690 = vld [vmem:[%s1 + $0xd8] sm:$0xff]
    %v691 = vld [vmem:[%s1 + $0xe0] sm:$0xff]
    %v693 = vsel %vm194, %v677, 0
    %v696 = vsel %vm194, %v680, 0
    %v699 = vsel %vm194, %v683, 0
    %v702 = vsel %vm194, %v686, 0
    %704 = vmatpush.msra.mxu0 0.0
    %705 = vmatpush.msra.mxu0 0.0
    %706 = vmatpush.msra.mxu0 0.0
    %707 = vmatpush.msra.mxu0 0.0
    %708 = vmatpush.msra.mxu0 0.0
    %709 = vmatpush.msra.mxu0 0.0
    %710 = vmatpush.msra.mxu0 0.0
    %711 = vmatpush.msra.mxu0 0.0
    %712 = vmatpush.msra.mxu0 0.0
    %713 = vmatpush.msra.mxu0 0.0
    %714 = vmatpush.msra.mxu0 0.0
    %715 = vmatpush.msra.mxu0 0.0
    %716 = vmatpush.msra.mxu0 %v691
    %717 = vmatpush.msra.mxu0 %v690
    %718 = vmatpush.msra.mxu0 %v689
    %719 = vmatpush.msra.mxu0 %v688
    %720 = vmatmul.f32.gmra.mxu0 %v693
    %v721 = vpop.f32.mrf.mxu0
    %v722 = vadd.f32 0.0, %v721
    %723 = vmatmul.f32.gmra.mxu0 %v696
    %v724 = vpop.f32.mrf.mxu0
    %v725 = vadd.f32 0.0, %v724
    %726 = vmatmul.f32.gmra.mxu0 %v699
    %v727 = vpop.f32.mrf.mxu0
    %v728 = vadd.f32 0.0, %v727
    %729 = vmatmul.f32.gmra.mxu0 %v702
    %v730 = vpop.f32.mrf.mxu0
    %v731 = vadd.f32 0.0, %v730
    %732 = vdwg.mxu0
    %v733 = vadd.f32 %v655, %v722
    %v734 = vadd.f32 %v656, %v725
    %v735 = vadd.f32 %v657, %v728
    %v736 = vadd.f32 %v658, %v731
    %v737 = vmax.f32 %v733, 0.0
    %v738 = vmax.f32 %v734, 0.0
    %v739 = vmax.f32 %v735, 0.0
    %v740 = vmax.f32 %v736, 0.0
    %741 = vmatpush.msra.mxu0 0.0
    %742 = vmatpush.msra.mxu0 0.0
    %743 = vmatpush.msra.mxu0 0.0
    %744 = vmatpush.msra.mxu0 0.0
    %745 = vmatpush.msra.mxu0 0.0
    %746 = vmatpush.msra.mxu0 0.0
    %747 = vmatpush.msra.mxu0 0.0
    %748 = vmatpush.msra.mxu0 0.0
    %749 = vmatpush.msra.mxu0 0.0
    %750 = vmatpush.msra.mxu0 0.0
    %751 = vmatpush.msra.mxu0 0.0
    %752 = vmatpush.msra.mxu0 0.0
    %753 = vmatpush.msra.mxu0 %v740
    %754 = vmatpush.msra.mxu0 %v739
    %755 = vmatpush.msra.mxu0 %v738
    %756 = vmatpush.msra.mxu0 %v737
    %757 = vmatmul.f32.gmra.mxu0 %v421
    %v758 = vpop.f32.mrf.mxu0
    %v759 = vadd.f32 0.0, %v758
    %760 = vmatmul.f32.gmra.mxu0 %v424
    %v761 = vpop.f32.mrf.mxu0
    %v762 = vadd.f32 0.0, %v761
    %763 = vmatmul.f32.gmra.mxu0 %v427
    %v764 = vpop.f32.mrf.mxu0
    %v765 = vadd.f32 0.0, %v764
    %766 = vmatmul.f32.gmra.mxu0 %v430
    %v767 = vpop.f32.mrf.mxu0
    %v768 = vadd.f32 0.0, %v767
    %769 = vdwg.mxu0
    %v770 = vld [vmem:[%s1 + $0x2e0] sm:$0x1]
    %v771 = vld [vmem:[%s1 + $0x2f8] sm:$0x1]
    %772 = vmatpush.msra.mxu0 0.0
    %773 = vmatpush.msra.mxu0 0.0
    %774 = vmatpush.msra.mxu0 0.0
    %775 = vmatpush.msra.mxu0 0.0
    %776 = vmatpush.msra.mxu0 0.0
    %777 = vmatpush.msra.mxu0 0.0
    %778 = vmatpush.msra.mxu0 0.0
    %779 = vmatpush.msra.mxu0 0.0
    %780 = vmatpush.msra.mxu0 0.0
    %781 = vmatpush.msra.mxu0 0.0
    %782 = vmatpush.msra.mxu0 0.0
    %783 = vmatpush.msra.mxu0 0.0
    %784 = vmatpush.msra.mxu0 %v768
    %785 = vmatpush.msra.mxu0 %v765
    %786 = vmatpush.msra.mxu0 %v762
    %787 = vmatpush.msra.mxu0 %v759
    %788 = vmatmul.f32.gmra.mxu0 %v462
    %v789 = vpop.f32.mrf.mxu0
    %v790 = vadd.f32 0.0, %v789
    %791 = vdwg.mxu0
    %v792 = vmul.f32 %v759, %v759
    %v793 = vmul.f32 %v762, %v762
    %v794 = vmul.f32 %v765, %v765
    %v795 = vmul.f32 %v768, %v768
    %796 = vmatpush.msra.mxu0 0.0
    %797 = vmatpush.msra.mxu0 0.0
    %798 = vmatpush.msra.mxu0 0.0
    %799 = vmatpush.msra.mxu0 0.0
    %800 = vmatpush.msra.mxu0 0.0
    %801 = vmatpush.msra.mxu0 0.0
    %802 = vmatpush.msra.mxu0 0.0
    %803 = vmatpush.msra.mxu0 0.0
    %804 = vmatpush.msra.mxu0 0.0
    %805 = vmatpush.msra.mxu0 0.0
    %806 = vmatpush.msra.mxu0 0.0
    %807 = vmatpush.msra.mxu0 0.0
    %808 = vmatpush.msra.mxu0 %v795
    %809 = vmatpush.msra.mxu0 %v794
    %810 = vmatpush.msra.mxu0 %v793
    %811 = vmatpush.msra.mxu0 %v792
    %812 = vmatmul.f32.gmra.mxu0 %v462
    %v813 = vpop.f32.mrf.mxu0
    %v814 = vadd.f32 0.0, %v813
    %815 = vdwg.mxu0
    %v816 = vmul.f32 %v790, 0.03125
    %v817 = vmul.f32 %v814, 0.03125
    %v818 = vmul.f32 %v816, %v816
    %v819 = vsub.f32 %v817, %v818
    %v820 = vmax.f32 %v819, 0.0
    %v821 = vadd.f32 %v820, 1e-05
    %v822 = vrsqrt.pop %v821
    %v823 = vmul.f32 %v822, %v821
    %v824 = vmul.f32 %v823, %v822
    %v825 = vmul.f32 0.5, %v824
    %v826 = vsub.f32 1.5, %v825
    %v827 = vmul.f32 %v822, %v826
    %vm828 = vweird.f32 %v821
    %vm829 = vweird.f32 %v822
    %vm830 = vmor %vm828, %vm829
    %v831 = vsel %vm830, %v822, %v827
    %v832 = vperm.slane %v816, 0
    %v833 = vsub.f32 %v759, %v832
    %v834 = vsub.f32 %v762, %v832
    %v835 = vsub.f32 %v765, %v832
    %v836 = vsub.f32 %v768, %v832
    %v837 = vmul.f32 %v831, %v770
    %v838 = vperm.slane %v837, 0
    %v839 = vmul.f32 %v833, %v838
    %v840 = vmul.f32 %v834, %v838
    %v841 = vmul.f32 %v835, %v838
    %v842 = vmul.f32 %v836, %v838
    %v843 = vperm.slane %v771, 0
    %v844 = vadd.f32 %v839, %v843
    %v845 = vadd.f32 %v840, %v843
    %v846 = vadd.f32 %v841, %v843
    %v847 = vadd.f32 %v842, %v843
    %v848 = vadd.f32 %v96, %v844
    %v849 = vadd.f32 %v97, %v845
    %v850 = vadd.f32 %v98, %v846
    %v851 = vadd.f32 %v99, %v847
    %v852 = vadd.s32 %v13, 4
    %v853 = vadd.s32 %v14, 4
    %v854 = vadd.s32 %v15, 4
    %v855 = vadd.s32 %v16, 4
    %vm856 = vcmp.eq.s32.totalorder %v18, %v852
    %vm857 = vcmp.eq.s32.totalorder %v18, %v853
    %vm858 = vcmp.eq.s32.totalorder %v18, %v854
    %vm859 = vcmp.eq.s32.totalorder %v18, %v855
    %v860 = vsel %vm856, 1, 0
    %v861 = vsel %vm857, 1, 0
    %v862 = vsel %vm858, 1, 0
    %v863 = vsel %vm859, 1, 0
    %v864 = vcvt.s32.f32 %v860
    %v865 = vcvt.s32.f32 %v861
    %v866 = vcvt.s32.f32 %v862
    %v867 = vcvt.s32.f32 %v863
    %vm868 = vcmp.ge.s32.totalorder %v13, 2
    %vm869 = vcmp.ge.s32.totalorder %v14, 2
    %vm870 = vcmp.ge.s32.totalorder %v15, 2
    %vm871 = vcmp.ge.s32.totalorder %v16, 2
    %vm872 = vcmp.lt.s32.totalorder %v13, 14
    %vm873 = vcmp.lt.s32.totalorder %v14, 14
    %vm874 = vcmp.lt.s32.totalorder %v15, 14
    %vm875 = vcmp.lt.s32.totalorder %v16, 14
    %vm876 = vmand %vm868, %vm872
    %vm877 = vmand %vm869, %vm873
    %vm878 = vmand %vm870, %vm874
    %vm879 = vmand %vm871, %vm875
    %vm880 = vcmp.ge.s32.totalorder %v13, 18
    %vm881 = vcmp.ge.s32.totalorder %v14, 18
    %vm882 = vcmp.ge.s32.totalorder %v15, 18
    %vm883 = vcmp.ge.s32.totalorder %v16, 18
    %vm884 = vcmp.lt.s32.totalorder %v13, 30
    %vm885 = vcmp.lt.s32.totalorder %v14, 30
    %vm886 = vcmp.lt.s32.totalorder %v15, 30
    %vm887 = vcmp.lt.s32.totalorder %v16, 30
    %vm888 = vmand %vm880, %vm884
    %vm889 = vmand %vm881, %vm885
    %vm890 = vmand %vm882, %vm886
    %vm891 = vmand %vm883, %vm887
    %vm892 = vmor %vm876, %vm888
    %vm893 = vmor %vm877, %vm889
    %vm894 = vmor %vm878, %vm890
    %vm895 = vmor %vm879, %vm891
    %v896 = vsub.s32 %v13, 2
    %v897 = vsub.s32 %v14, 2
    %v898 = vsub.s32 %v15, 2
    %v899 = vsub.s32 %v16, 2
    %vm900 = vcmp.eq.s32.totalorder %v18, %v896
    %vm901 = vcmp.eq.s32.totalorder %v18, %v897
    %vm902 = vcmp.eq.s32.totalorder %v18, %v898
    %vm903 = vcmp.eq.s32.totalorder %v18, %v899
    %v904 = vsel %vm900, 1, 0
    %v905 = vsel %vm901, 1, 0
    %v906 = vsel %vm902, 1, 0
    %v907 = vsel %vm903, 1, 0
    %v908 = vcvt.s32.f32 %v904
    %v909 = vcvt.s32.f32 %v905
    %v910 = vcvt.s32.f32 %v906
    %v911 = vcvt.s32.f32 %v907
    %v912 = vsel %vm892, 1, 0
    %v913 = vsel %vm893, 1, 0
    %v914 = vsel %vm894, 1, 0
    %v915 = vsel %vm895, 1, 0
    %v916 = vcvt.s32.f32 %v912
    %v917 = vcvt.s32.f32 %v913
    %v918 = vcvt.s32.f32 %v914
    %v919 = vcvt.s32.f32 %v915
    %v920 = vmul.f32 %v908, %v916
    %v921 = vmul.f32 %v909, %v917
    %v922 = vmul.f32 %v910, %v918
    %v923 = vmul.f32 %v911, %v919
    %v924 = vld [vmem:[%s1 + $0xe8] sm:$0xff]
    %v925 = vld [vmem:[%s1 + $0xf0] sm:$0xff]
    %v926 = vld [vmem:[%s1 + $0xf8] sm:$0xff]
    %v927 = vld [vmem:[%s1 + $0x100] sm:$0xff]
    %v928 = vld [vmem:[%s1 + $0x2c0] sm:$0x1]
    %v929 = vperm.slane %v928, 0
    %v931 = vsel %vm194, %v848, 0
    %v934 = vsel %vm194, %v849, 0
    %v937 = vsel %vm194, %v850, 0
    %v940 = vsel %vm194, %v851, 0
    %942 = vmatpush.msra.mxu0 0.0
    %943 = vmatpush.msra.mxu0 0.0
    %944 = vmatpush.msra.mxu0 0.0
    %945 = vmatpush.msra.mxu0 0.0
    %946 = vmatpush.msra.mxu0 0.0
    %947 = vmatpush.msra.mxu0 0.0
    %948 = vmatpush.msra.mxu0 0.0
    %949 = vmatpush.msra.mxu0 0.0
    %950 = vmatpush.msra.mxu0 0.0
    %951 = vmatpush.msra.mxu0 0.0
    %952 = vmatpush.msra.mxu0 0.0
    %953 = vmatpush.msra.mxu0 0.0
    %954 = vmatpush.msra.mxu0 %v927
    %955 = vmatpush.msra.mxu0 %v926
    %956 = vmatpush.msra.mxu0 %v925
    %957 = vmatpush.msra.mxu0 %v924
    %958 = vmatmul.f32.gmra.mxu0 %v931
    %v959 = vpop.f32.mrf.mxu0
    %v960 = vadd.f32 %v929, %v959
    %961 = vmatmul.f32.gmra.mxu0 %v934
    %v962 = vpop.f32.mrf.mxu0
    %v963 = vadd.f32 %v929, %v962
    %964 = vmatmul.f32.gmra.mxu0 %v937
    %v965 = vpop.f32.mrf.mxu0
    %v966 = vadd.f32 %v929, %v965
    %967 = vmatmul.f32.gmra.mxu0 %v940
    %v968 = vpop.f32.mrf.mxu0
    %v969 = vadd.f32 %v929, %v968
    %970 = vdwg.mxu0
    %971 = vmatpush.msra.mxu0 0.0
    %972 = vmatpush.msra.mxu0 0.0
    %973 = vmatpush.msra.mxu0 0.0
    %974 = vmatpush.msra.mxu0 0.0
    %975 = vmatpush.msra.mxu0 0.0
    %976 = vmatpush.msra.mxu0 0.0
    %977 = vmatpush.msra.mxu0 0.0
    %978 = vmatpush.msra.mxu0 0.0
    %979 = vmatpush.msra.mxu0 0.0
    %980 = vmatpush.msra.mxu0 0.0
    %981 = vmatpush.msra.mxu0 0.0
    %982 = vmatpush.msra.mxu0 0.0
    %983 = vmatpush.msra.mxu0 %v851
    %984 = vmatpush.msra.mxu0 %v850
    %985 = vmatpush.msra.mxu0 %v849
    %986 = vmatpush.msra.mxu0 %v848
    %987 = vmatmul.f32.gmra.mxu0 %v327
    %v988 = vpop.f32.mrf.mxu0
    %v989 = vadd.f32 0.0, %v988
    %990 = vmatmul.f32.gmra.mxu0 %v330
    %v991 = vpop.f32.mrf.mxu0
    %v992 = vadd.f32 0.0, %v991
    %993 = vmatmul.f32.gmra.mxu0 %v333
    %v994 = vpop.f32.mrf.mxu0
    %v995 = vadd.f32 0.0, %v994
    %996 = vmatmul.f32.gmra.mxu0 %v336
    %v997 = vpop.f32.mrf.mxu0
    %v998 = vadd.f32 0.0, %v997
    %999 = vdwg.mxu0
    %v1000 = vld [vmem:[%s1 + $0x108] sm:$0xff]
    %v1001 = vld [vmem:[%s1 + $0x110] sm:$0xff]
    %v1002 = vld [vmem:[%s1 + $0x118] sm:$0xff]
    %v1003 = vld [vmem:[%s1 + $0x120] sm:$0xff]
    %v1005 = vsel %vm194, %v989, 0
    %v1008 = vsel %vm194, %v992, 0
    %v1011 = vsel %vm194, %v995, 0
    %v1014 = vsel %vm194, %v998, 0
    %1016 = vmatpush.msra.mxu0 0.0
    %1017 = vmatpush.msra.mxu0 0.0
    %1018 = vmatpush.msra.mxu0 0.0
    %1019 = vmatpush.msra.mxu0 0.0
    %1020 = vmatpush.msra.mxu0 0.0
    %1021 = vmatpush.msra.mxu0 0.0
    %1022 = vmatpush.msra.mxu0 0.0
    %1023 = vmatpush.msra.mxu0 0.0
    %1024 = vmatpush.msra.mxu0 0.0
    %1025 = vmatpush.msra.mxu0 0.0
    %1026 = vmatpush.msra.mxu0 0.0
    %1027 = vmatpush.msra.mxu0 0.0
    %1028 = vmatpush.msra.mxu0 %v1003
    %1029 = vmatpush.msra.mxu0 %v1002
    %1030 = vmatpush.msra.mxu0 %v1001
    %1031 = vmatpush.msra.mxu0 %v1000
    %1032 = vmatmul.f32.gmra.mxu0 %v1005
    %v1033 = vpop.f32.mrf.mxu0
    %v1034 = vadd.f32 0.0, %v1033
    %1035 = vmatmul.f32.gmra.mxu0 %v1008
    %v1036 = vpop.f32.mrf.mxu0
    %v1037 = vadd.f32 0.0, %v1036
    %1038 = vmatmul.f32.gmra.mxu0 %v1011
    %v1039 = vpop.f32.mrf.mxu0
    %v1040 = vadd.f32 0.0, %v1039
    %1041 = vmatmul.f32.gmra.mxu0 %v1014
    %v1042 = vpop.f32.mrf.mxu0
    %v1043 = vadd.f32 0.0, %v1042
    %1044 = vdwg.mxu0
    %v1045 = vadd.f32 %v960, %v1034
    %v1046 = vadd.f32 %v963, %v1037
    %v1047 = vadd.f32 %v966, %v1040
    %v1048 = vadd.f32 %v969, %v1043
    %v1050 = vsel %vm194, %v864, 0
    %v1053 = vsel %vm194, %v865, 0
    %v1056 = vsel %vm194, %v866, 0
    %v1059 = vsel %vm194, %v867, 0
    %1061 = vmatpush.msra.mxu0 0.0
    %1062 = vmatpush.msra.mxu0 0.0
    %1063 = vmatpush.msra.mxu0 0.0
    %1064 = vmatpush.msra.mxu0 0.0
    %1065 = vmatpush.msra.mxu0 0.0
    %1066 = vmatpush.msra.mxu0 0.0
    %1067 = vmatpush.msra.mxu0 0.0
    %1068 = vmatpush.msra.mxu0 0.0
    %1069 = vmatpush.msra.mxu0 0.0
    %1070 = vmatpush.msra.mxu0 0.0
    %1071 = vmatpush.msra.mxu0 0.0
    %1072 = vmatpush.msra.mxu0 0.0
    %1073 = vmatpush.msra.mxu0 %v851
    %1074 = vmatpush.msra.mxu0 %v850
    %1075 = vmatpush.msra.mxu0 %v849
    %1076 = vmatpush.msra.mxu0 %v848
    %1077 = vmatmul.f32.gmra.mxu0 %v1050
    %v1078 = vpop.f32.mrf.mxu0
    %v1079 = vadd.f32 0.0, %v1078
    %1080 = vmatmul.f32.gmra.mxu0 %v1053
    %v1081 = vpop.f32.mrf.mxu0
    %v1082 = vadd.f32 0.0, %v1081
    %1083 = vmatmul.f32.gmra.mxu0 %v1056
    %v1084 = vpop.f32.mrf.mxu0
    %v1085 = vadd.f32 0.0, %v1084
    %1086 = vmatmul.f32.gmra.mxu0 %v1059
    %v1087 = vpop.f32.mrf.mxu0
    %v1088 = vadd.f32 0.0, %v1087
    %1089 = vdwg.mxu0
    %v1090 = vld [vmem:[%s1 + $0x128] sm:$0xff]
    %v1091 = vld [vmem:[%s1 + $0x130] sm:$0xff]
    %v1092 = vld [vmem:[%s1 + $0x138] sm:$0xff]
    %v1093 = vld [vmem:[%s1 + $0x140] sm:$0xff]
    %v1095 = vsel %vm194, %v1079, 0
    %v1098 = vsel %vm194, %v1082, 0
    %v1101 = vsel %vm194, %v1085, 0
    %v1104 = vsel %vm194, %v1088, 0
    %1106 = vmatpush.msra.mxu0 0.0
    %1107 = vmatpush.msra.mxu0 0.0
    %1108 = vmatpush.msra.mxu0 0.0
    %1109 = vmatpush.msra.mxu0 0.0
    %1110 = vmatpush.msra.mxu0 0.0
    %1111 = vmatpush.msra.mxu0 0.0
    %1112 = vmatpush.msra.mxu0 0.0
    %1113 = vmatpush.msra.mxu0 0.0
    %1114 = vmatpush.msra.mxu0 0.0
    %1115 = vmatpush.msra.mxu0 0.0
    %1116 = vmatpush.msra.mxu0 0.0
    %1117 = vmatpush.msra.mxu0 0.0
    %1118 = vmatpush.msra.mxu0 %v1093
    %1119 = vmatpush.msra.mxu0 %v1092
    %1120 = vmatpush.msra.mxu0 %v1091
    %1121 = vmatpush.msra.mxu0 %v1090
    %1122 = vmatmul.f32.gmra.mxu0 %v1095
    %v1123 = vpop.f32.mrf.mxu0
    %v1124 = vadd.f32 0.0, %v1123
    %1125 = vmatmul.f32.gmra.mxu0 %v1098
    %v1126 = vpop.f32.mrf.mxu0
    %v1127 = vadd.f32 0.0, %v1126
    %1128 = vmatmul.f32.gmra.mxu0 %v1101
    %v1129 = vpop.f32.mrf.mxu0
    %v1130 = vadd.f32 0.0, %v1129
    %1131 = vmatmul.f32.gmra.mxu0 %v1104
    %v1132 = vpop.f32.mrf.mxu0
    %v1133 = vadd.f32 0.0, %v1132
    %1134 = vdwg.mxu0
    %v1135 = vadd.f32 %v1045, %v1124
    %v1136 = vadd.f32 %v1046, %v1127
    %v1137 = vadd.f32 %v1047, %v1130
    %v1138 = vadd.f32 %v1048, %v1133
    %v1139 = vmax.f32 %v1135, 0.0
    %v1140 = vmax.f32 %v1136, 0.0
    %v1141 = vmax.f32 %v1137, 0.0
    %v1142 = vmax.f32 %v1138, 0.0
    %v1144 = vsel %vm194, %v920, 0
    %v1147 = vsel %vm194, %v921, 0
    %v1150 = vsel %vm194, %v922, 0
    %v1153 = vsel %vm194, %v923, 0
    %1155 = vmatpush.msra.mxu0 0.0
    %1156 = vmatpush.msra.mxu0 0.0
    %1157 = vmatpush.msra.mxu0 0.0
    %1158 = vmatpush.msra.mxu0 0.0
    %1159 = vmatpush.msra.mxu0 0.0
    %1160 = vmatpush.msra.mxu0 0.0
    %1161 = vmatpush.msra.mxu0 0.0
    %1162 = vmatpush.msra.mxu0 0.0
    %1163 = vmatpush.msra.mxu0 0.0
    %1164 = vmatpush.msra.mxu0 0.0
    %1165 = vmatpush.msra.mxu0 0.0
    %1166 = vmatpush.msra.mxu0 0.0
    %1167 = vmatpush.msra.mxu0 %v1142
    %1168 = vmatpush.msra.mxu0 %v1141
    %1169 = vmatpush.msra.mxu0 %v1140
    %1170 = vmatpush.msra.mxu0 %v1139
    %1171 = vmatmul.f32.gmra.mxu0 %v1144
    %v1172 = vpop.f32.mrf.mxu0
    %v1173 = vadd.f32 0.0, %v1172
    %1174 = vmatmul.f32.gmra.mxu0 %v1147
    %v1175 = vpop.f32.mrf.mxu0
    %v1176 = vadd.f32 0.0, %v1175
    %1177 = vmatmul.f32.gmra.mxu0 %v1150
    %v1178 = vpop.f32.mrf.mxu0
    %v1179 = vadd.f32 0.0, %v1178
    %1180 = vmatmul.f32.gmra.mxu0 %v1153
    %v1181 = vpop.f32.mrf.mxu0
    %v1182 = vadd.f32 0.0, %v1181
    %1183 = vdwg.mxu0
    %1184 = vmatpush.msra.mxu0 0.0
    %1185 = vmatpush.msra.mxu0 0.0
    %1186 = vmatpush.msra.mxu0 0.0
    %1187 = vmatpush.msra.mxu0 0.0
    %1188 = vmatpush.msra.mxu0 0.0
    %1189 = vmatpush.msra.mxu0 0.0
    %1190 = vmatpush.msra.mxu0 0.0
    %1191 = vmatpush.msra.mxu0 0.0
    %1192 = vmatpush.msra.mxu0 0.0
    %1193 = vmatpush.msra.mxu0 0.0
    %1194 = vmatpush.msra.mxu0 0.0
    %1195 = vmatpush.msra.mxu0 0.0
    %1196 = vmatpush.msra.mxu0 %v1182
    %1197 = vmatpush.msra.mxu0 %v1179
    %1198 = vmatpush.msra.mxu0 %v1176
    %1199 = vmatpush.msra.mxu0 %v1173
    %1200 = vmatmul.f32.gmra.mxu0 %v462
    %v1201 = vpop.f32.mrf.mxu0
    %v1202 = vadd.f32 0.0, %v1201
    %1203 = vdwg.mxu0
    %v1204 = vmul.f32 %v1173, %v1173
    %v1205 = vmul.f32 %v1176, %v1176
    %v1206 = vmul.f32 %v1179, %v1179
    %v1207 = vmul.f32 %v1182, %v1182
    %1208 = vmatpush.msra.mxu0 0.0
    %1209 = vmatpush.msra.mxu0 0.0
    %1210 = vmatpush.msra.mxu0 0.0
    %1211 = vmatpush.msra.mxu0 0.0
    %1212 = vmatpush.msra.mxu0 0.0
    %1213 = vmatpush.msra.mxu0 0.0
    %1214 = vmatpush.msra.mxu0 0.0
    %1215 = vmatpush.msra.mxu0 0.0
    %1216 = vmatpush.msra.mxu0 0.0
    %1217 = vmatpush.msra.mxu0 0.0
    %1218 = vmatpush.msra.mxu0 0.0
    %1219 = vmatpush.msra.mxu0 0.0
    %1220 = vmatpush.msra.mxu0 %v1207
    %1221 = vmatpush.msra.mxu0 %v1206
    %1222 = vmatpush.msra.mxu0 %v1205
    %1223 = vmatpush.msra.mxu0 %v1204
    %1224 = vmatmul.f32.gmra.mxu0 %v462
    %v1225 = vpop.f32.mrf.mxu0
    %v1226 = vadd.f32 0.0, %v1225
    %1227 = vdwg.mxu0
    %v1228 = vmul.f32 %v1202, 0.03125
    %v1229 = vmul.f32 %v1226, 0.03125
    %v1230 = vmul.f32 %v1228, %v1228
    %v1231 = vsub.f32 %v1229, %v1230
    %v1232 = vmax.f32 %v1231, 0.0
    %v1233 = vadd.f32 %v1232, 1e-05
    %v1234 = vrsqrt.pop %v1233
    %v1235 = vmul.f32 %v1234, %v1233
    %v1236 = vmul.f32 %v1235, %v1234
    %v1237 = vmul.f32 0.5, %v1236
    %v1238 = vsub.f32 1.5, %v1237
    %v1239 = vmul.f32 %v1234, %v1238
    %vm1240 = vweird.f32 %v1233
    %vm1241 = vweird.f32 %v1234
    %vm1242 = vmor %vm1240, %vm1241
    %v1243 = vsel %vm1242, %v1234, %v1239
    %v1244 = vperm.slane %v1228, 0
    %v1245 = vsub.f32 %v1173, %v1244
    %v1246 = vsub.f32 %v1176, %v1244
    %v1247 = vsub.f32 %v1179, %v1244
    %v1248 = vsub.f32 %v1182, %v1244
    %v1249 = vperm.slane %v1243, 0
    %v1250 = vmul.f32 %v1245, %v1249
    %v1251 = vmul.f32 %v1246, %v1249
    %v1252 = vmul.f32 %v1247, %v1249
    %v1253 = vmul.f32 %v1248, %v1249
    %v1254 = vld [vmem:[%s1 + $0x148] sm:$0xff]
    %v1255 = vld [vmem:[%s1 + $0x150] sm:$0xff]
    %v1256 = vld [vmem:[%s1 + $0x158] sm:$0xff]
    %v1257 = vld [vmem:[%s1 + $0x160] sm:$0xff]
    %v1258 = vld [vmem:[%s1 + $0x2c8] sm:$0x1]
    %v1259 = vperm.slane %v1258, 0
    %v1261 = vsel %vm194, %v1250, 0
    %v1264 = vsel %vm194, %v1251, 0
    %v1267 = vsel %vm194, %v1252, 0
    %v1270 = vsel %vm194, %v1253, 0
    %1272 = vmatpush.msra.mxu0 0.0
    %1273 = vmatpush.msra.mxu0 0.0
    %1274 = vmatpush.msra.mxu0 0.0
    %1275 = vmatpush.msra.mxu0 0.0
    %1276 = vmatpush.msra.mxu0 0.0
    %1277 = vmatpush.msra.mxu0 0.0
    %1278 = vmatpush.msra.mxu0 0.0
    %1279 = vmatpush.msra.mxu0 0.0
    %1280 = vmatpush.msra.mxu0 0.0
    %1281 = vmatpush.msra.mxu0 0.0
    %1282 = vmatpush.msra.mxu0 0.0
    %1283 = vmatpush.msra.mxu0 0.0
    %1284 = vmatpush.msra.mxu0 %v1257
    %1285 = vmatpush.msra.mxu0 %v1256
    %1286 = vmatpush.msra.mxu0 %v1255
    %1287 = vmatpush.msra.mxu0 %v1254
    %1288 = vmatmul.f32.gmra.mxu0 %v1261
    %v1289 = vpop.f32.mrf.mxu0
    %v1290 = vadd.f32 %v1259, %v1289
    %1291 = vmatmul.f32.gmra.mxu0 %v1264
    %v1292 = vpop.f32.mrf.mxu0
    %v1293 = vadd.f32 %v1259, %v1292
    %1294 = vmatmul.f32.gmra.mxu0 %v1267
    %v1295 = vpop.f32.mrf.mxu0
    %v1296 = vadd.f32 %v1259, %v1295
    %1297 = vmatmul.f32.gmra.mxu0 %v1270
    %v1298 = vpop.f32.mrf.mxu0
    %v1299 = vadd.f32 %v1259, %v1298
    %1300 = vdwg.mxu0
    %1301 = vmatpush.msra.mxu0 0.0
    %1302 = vmatpush.msra.mxu0 0.0
    %1303 = vmatpush.msra.mxu0 0.0
    %1304 = vmatpush.msra.mxu0 0.0
    %1305 = vmatpush.msra.mxu0 0.0
    %1306 = vmatpush.msra.mxu0 0.0
    %1307 = vmatpush.msra.mxu0 0.0
    %1308 = vmatpush.msra.mxu0 0.0
    %1309 = vmatpush.msra.mxu0 0.0
    %1310 = vmatpush.msra.mxu0 0.0
    %1311 = vmatpush.msra.mxu0 0.0
    %1312 = vmatpush.msra.mxu0 0.0
    %1313 = vmatpush.msra.mxu0 %v1253
    %1314 = vmatpush.msra.mxu0 %v1252
    %1315 = vmatpush.msra.mxu0 %v1251
    %1316 = vmatpush.msra.mxu0 %v1250
    %1317 = vmatmul.f32.gmra.mxu0 %v327
    %v1318 = vpop.f32.mrf.mxu0
    %v1319 = vadd.f32 0.0, %v1318
    %1320 = vmatmul.f32.gmra.mxu0 %v330
    %v1321 = vpop.f32.mrf.mxu0
    %v1322 = vadd.f32 0.0, %v1321
    %1323 = vmatmul.f32.gmra.mxu0 %v333
    %v1324 = vpop.f32.mrf.mxu0
    %v1325 = vadd.f32 0.0, %v1324
    %1326 = vmatmul.f32.gmra.mxu0 %v336
    %v1327 = vpop.f32.mrf.mxu0
    %v1328 = vadd.f32 0.0, %v1327
    %1329 = vdwg.mxu0
    %v1330 = vld [vmem:[%s1 + $0x168] sm:$0xff]
    %v1331 = vld [vmem:[%s1 + $0x170] sm:$0xff]
    %v1332 = vld [vmem:[%s1 + $0x178] sm:$0xff]
    %v1333 = vld [vmem:[%s1 + $0x180] sm:$0xff]
    %v1335 = vsel %vm194, %v1319, 0
    %v1338 = vsel %vm194, %v1322, 0
    %v1341 = vsel %vm194, %v1325, 0
    %v1344 = vsel %vm194, %v1328, 0
    %1346 = vmatpush.msra.mxu0 0.0
    %1347 = vmatpush.msra.mxu0 0.0
    %1348 = vmatpush.msra.mxu0 0.0
    %1349 = vmatpush.msra.mxu0 0.0
    %1350 = vmatpush.msra.mxu0 0.0
    %1351 = vmatpush.msra.mxu0 0.0
    %1352 = vmatpush.msra.mxu0 0.0
    %1353 = vmatpush.msra.mxu0 0.0
    %1354 = vmatpush.msra.mxu0 0.0
    %1355 = vmatpush.msra.mxu0 0.0
    %1356 = vmatpush.msra.mxu0 0.0
    %1357 = vmatpush.msra.mxu0 0.0
    %1358 = vmatpush.msra.mxu0 %v1333
    %1359 = vmatpush.msra.mxu0 %v1332
    %1360 = vmatpush.msra.mxu0 %v1331
    %1361 = vmatpush.msra.mxu0 %v1330
    %1362 = vmatmul.f32.gmra.mxu0 %v1335
    %v1363 = vpop.f32.mrf.mxu0
    %v1364 = vadd.f32 0.0, %v1363
    %1365 = vmatmul.f32.gmra.mxu0 %v1338
    %v1366 = vpop.f32.mrf.mxu0
    %v1367 = vadd.f32 0.0, %v1366
    %1368 = vmatmul.f32.gmra.mxu0 %v1341
    %v1369 = vpop.f32.mrf.mxu0
    %v1370 = vadd.f32 0.0, %v1369
    %1371 = vmatmul.f32.gmra.mxu0 %v1344
    %v1372 = vpop.f32.mrf.mxu0
    %v1373 = vadd.f32 0.0, %v1372
    %1374 = vdwg.mxu0
    %v1375 = vadd.f32 %v1290, %v1364
    %v1376 = vadd.f32 %v1293, %v1367
    %v1377 = vadd.f32 %v1296, %v1370
    %v1378 = vadd.f32 %v1299, %v1373
    %1379 = vmatpush.msra.mxu0 0.0
    %1380 = vmatpush.msra.mxu0 0.0
    %1381 = vmatpush.msra.mxu0 0.0
    %1382 = vmatpush.msra.mxu0 0.0
    %1383 = vmatpush.msra.mxu0 0.0
    %1384 = vmatpush.msra.mxu0 0.0
    %1385 = vmatpush.msra.mxu0 0.0
    %1386 = vmatpush.msra.mxu0 0.0
    %1387 = vmatpush.msra.mxu0 0.0
    %1388 = vmatpush.msra.mxu0 0.0
    %1389 = vmatpush.msra.mxu0 0.0
    %1390 = vmatpush.msra.mxu0 0.0
    %1391 = vmatpush.msra.mxu0 %v1253
    %1392 = vmatpush.msra.mxu0 %v1252
    %1393 = vmatpush.msra.mxu0 %v1251
    %1394 = vmatpush.msra.mxu0 %v1250
    %1395 = vmatmul.f32.gmra.mxu0 %v1050
    %v1396 = vpop.f32.mrf.mxu0
    %v1397 = vadd.f32 0.0, %v1396
    %1398 = vmatmul.f32.gmra.mxu0 %v1053
    %v1399 = vpop.f32.mrf.mxu0
    %v1400 = vadd.f32 0.0, %v1399
    %1401 = vmatmul.f32.gmra.mxu0 %v1056
    %v1402 = vpop.f32.mrf.mxu0
    %v1403 = vadd.f32 0.0, %v1402
    %1404 = vmatmul.f32.gmra.mxu0 %v1059
    %v1405 = vpop.f32.mrf.mxu0
    %v1406 = vadd.f32 0.0, %v1405
    %1407 = vdwg.mxu0
    %v1408 = vld [vmem:[%s1 + $0x188] sm:$0xff]
    %v1409 = vld [vmem:[%s1 + $0x190] sm:$0xff]
    %v1410 = vld [vmem:[%s1 + $0x198] sm:$0xff]
    %v1411 = vld [vmem:[%s1 + $0x1a0] sm:$0xff]
    %v1413 = vsel %vm194, %v1397, 0
    %v1416 = vsel %vm194, %v1400, 0
    %v1419 = vsel %vm194, %v1403, 0
    %v1422 = vsel %vm194, %v1406, 0
    %1424 = vmatpush.msra.mxu0 0.0
    %1425 = vmatpush.msra.mxu0 0.0
    %1426 = vmatpush.msra.mxu0 0.0
    %1427 = vmatpush.msra.mxu0 0.0
    %1428 = vmatpush.msra.mxu0 0.0
    %1429 = vmatpush.msra.mxu0 0.0
    %1430 = vmatpush.msra.mxu0 0.0
    %1431 = vmatpush.msra.mxu0 0.0
    %1432 = vmatpush.msra.mxu0 0.0
    %1433 = vmatpush.msra.mxu0 0.0
    %1434 = vmatpush.msra.mxu0 0.0
    %1435 = vmatpush.msra.mxu0 0.0
    %1436 = vmatpush.msra.mxu0 %v1411
    %1437 = vmatpush.msra.mxu0 %v1410
    %1438 = vmatpush.msra.mxu0 %v1409
    %1439 = vmatpush.msra.mxu0 %v1408
    %1440 = vmatmul.f32.gmra.mxu0 %v1413
    %v1441 = vpop.f32.mrf.mxu0
    %v1442 = vadd.f32 0.0, %v1441
    %1443 = vmatmul.f32.gmra.mxu0 %v1416
    %v1444 = vpop.f32.mrf.mxu0
    %v1445 = vadd.f32 0.0, %v1444
    %1446 = vmatmul.f32.gmra.mxu0 %v1419
    %v1447 = vpop.f32.mrf.mxu0
    %v1448 = vadd.f32 0.0, %v1447
    %1449 = vmatmul.f32.gmra.mxu0 %v1422
    %v1450 = vpop.f32.mrf.mxu0
    %v1451 = vadd.f32 0.0, %v1450
    %1452 = vdwg.mxu0
    %v1453 = vadd.f32 %v1375, %v1442
    %v1454 = vadd.f32 %v1376, %v1445
    %v1455 = vadd.f32 %v1377, %v1448
    %v1456 = vadd.f32 %v1378, %v1451
    %v1457 = vmax.f32 %v1453, 0.0
    %v1458 = vmax.f32 %v1454, 0.0
    %v1459 = vmax.f32 %v1455, 0.0
    %v1460 = vmax.f32 %v1456, 0.0
    %1461 = vmatpush.msra.mxu0 0.0
    %1462 = vmatpush.msra.mxu0 0.0
    %1463 = vmatpush.msra.mxu0 0.0
    %1464 = vmatpush.msra.mxu0 0.0
    %1465 = vmatpush.msra.mxu0 0.0
    %1466 = vmatpush.msra.mxu0 0.0
    %1467 = vmatpush.msra.mxu0 0.0
    %1468 = vmatpush.msra.mxu0 0.0
    %1469 = vmatpush.msra.mxu0 0.0
    %1470 = vmatpush.msra.mxu0 0.0
    %1471 = vmatpush.msra.mxu0 0.0
    %1472 = vmatpush.msra.mxu0 0.0
    %1473 = vmatpush.msra.mxu0 %v1460
    %1474 = vmatpush.msra.mxu0 %v1459
    %1475 = vmatpush.msra.mxu0 %v1458
    %1476 = vmatpush.msra.mxu0 %v1457
    %1477 = vmatmul.f32.gmra.mxu0 %v1144
    %v1478 = vpop.f32.mrf.mxu0
    %v1479 = vadd.f32 0.0, %v1478
    %1480 = vmatmul.f32.gmra.mxu0 %v1147
    %v1481 = vpop.f32.mrf.mxu0
    %v1482 = vadd.f32 0.0, %v1481
    %1483 = vmatmul.f32.gmra.mxu0 %v1150
    %v1484 = vpop.f32.mrf.mxu0
    %v1485 = vadd.f32 0.0, %v1484
    %1486 = vmatmul.f32.gmra.mxu0 %v1153
    %v1487 = vpop.f32.mrf.mxu0
    %v1488 = vadd.f32 0.0, %v1487
    %1489 = vdwg.mxu0
    %v1490 = vld [vmem:[%s1 + $0x2e8] sm:$0x1]
    %v1491 = vld [vmem:[%s1 + $0x300] sm:$0x1]
    %1492 = vmatpush.msra.mxu0 0.0
    %1493 = vmatpush.msra.mxu0 0.0
    %1494 = vmatpush.msra.mxu0 0.0
    %1495 = vmatpush.msra.mxu0 0.0
    %1496 = vmatpush.msra.mxu0 0.0
    %1497 = vmatpush.msra.mxu0 0.0
    %1498 = vmatpush.msra.mxu0 0.0
    %1499 = vmatpush.msra.mxu0 0.0
    %1500 = vmatpush.msra.mxu0 0.0
    %1501 = vmatpush.msra.mxu0 0.0
    %1502 = vmatpush.msra.mxu0 0.0
    %1503 = vmatpush.msra.mxu0 0.0
    %1504 = vmatpush.msra.mxu0 %v1488
    %1505 = vmatpush.msra.mxu0 %v1485
    %1506 = vmatpush.msra.mxu0 %v1482
    %1507 = vmatpush.msra.mxu0 %v1479
    %1508 = vmatmul.f32.gmra.mxu0 %v462
    %v1509 = vpop.f32.mrf.mxu0
    %v1510 = vadd.f32 0.0, %v1509
    %1511 = vdwg.mxu0
    %v1512 = vmul.f32 %v1479, %v1479
    %v1513 = vmul.f32 %v1482, %v1482
    %v1514 = vmul.f32 %v1485, %v1485
    %v1515 = vmul.f32 %v1488, %v1488
    %1516 = vmatpush.msra.mxu0 0.0
    %1517 = vmatpush.msra.mxu0 0.0
    %1518 = vmatpush.msra.mxu0 0.0
    %1519 = vmatpush.msra.mxu0 0.0
    %1520 = vmatpush.msra.mxu0 0.0
    %1521 = vmatpush.msra.mxu0 0.0
    %1522 = vmatpush.msra.mxu0 0.0
    %1523 = vmatpush.msra.mxu0 0.0
    %1524 = vmatpush.msra.mxu0 0.0
    %1525 = vmatpush.msra.mxu0 0.0
    %1526 = vmatpush.msra.mxu0 0.0
    %1527 = vmatpush.msra.mxu0 0.0
    %1528 = vmatpush.msra.mxu0 %v1515
    %1529 = vmatpush.msra.mxu0 %v1514
    %1530 = vmatpush.msra.mxu0 %v1513
    %1531 = vmatpush.msra.mxu0 %v1512
    %1532 = vmatmul.f32.gmra.mxu0 %v462
    %v1533 = vpop.f32.mrf.mxu0
    %v1534 = vadd.f32 0.0, %v1533
    %1535 = vdwg.mxu0
    %v1536 = vmul.f32 %v1510, 0.03125
    %v1537 = vmul.f32 %v1534, 0.03125
    %v1538 = vmul.f32 %v1536, %v1536
    %v1539 = vsub.f32 %v1537, %v1538
    %v1540 = vmax.f32 %v1539, 0.0
    %v1541 = vadd.f32 %v1540, 1e-05
    %v1542 = vrsqrt.pop %v1541
    %v1543 = vmul.f32 %v1542, %v1541
    %v1544 = vmul.f32 %v1543, %v1542
    %v1545 = vmul.f32 0.5, %v1544
    %v1546 = vsub.f32 1.5, %v1545
    %v1547 = vmul.f32 %v1542, %v1546
    %vm1548 = vweird.f32 %v1541
    %vm1549 = vweird.f32 %v1542
    %vm1550 = vmor %vm1548, %vm1549
    %v1551 = vsel %vm1550, %v1542, %v1547
    %v1552 = vperm.slane %v1536, 0
    %v1553 = vsub.f32 %v1479, %v1552
    %v1554 = vsub.f32 %v1482, %v1552
    %v1555 = vsub.f32 %v1485, %v1552
    %v1556 = vsub.f32 %v1488, %v1552
    %v1557 = vmul.f32 %v1551, %v1490
    %v1558 = vperm.slane %v1557, 0
    %v1559 = vmul.f32 %v1553, %v1558
    %v1560 = vmul.f32 %v1554, %v1558
    %v1561 = vmul.f32 %v1555, %v1558
    %v1562 = vmul.f32 %v1556, %v1558
    %v1563 = vperm.slane %v1491, 0
    %v1564 = vadd.f32 %v1559, %v1563
    %v1565 = vadd.f32 %v1560, %v1563
    %v1566 = vadd.f32 %v1561, %v1563
    %v1567 = vadd.f32 %v1562, %v1563
    %v1568 = vadd.f32 %v848, %v1564
    %v1569 = vadd.f32 %v849, %v1565
    %v1570 = vadd.f32 %v850, %v1566
    %v1571 = vadd.f32 %v851, %v1567
    %v1572 = vadd.s32 %v14, 8
    %v1573 = vadd.s32 %v15, 8
    %v1574 = vadd.s32 %v16, 8
    %vm1575 = vcmp.eq.s32.totalorder %v18, %v14
    %vm1576 = vcmp.eq.s32.totalorder %v18, %v1572
    %vm1577 = vcmp.eq.s32.totalorder %v18, %v1573
    %vm1578 = vcmp.eq.s32.totalorder %v18, %v1574
    %v1579 = vsel %vm1575, 1, 0
    %v1580 = vsel %vm1576, 1, 0
    %v1581 = vsel %vm1577, 1, 0
    %v1582 = vsel %vm1578, 1, 0
    %v1583 = vcvt.s32.f32 %v1579
    %v1584 = vcvt.s32.f32 %v1580
    %v1585 = vcvt.s32.f32 %v1581
    %v1586 = vcvt.s32.f32 %v1582
    %vm1587 = vcmp.ge.s32.totalorder %v13, 4
    %vm1588 = vcmp.ge.s32.totalorder %v14, 4
    %vm1589 = vcmp.ge.s32.totalorder %v15, 4
    %vm1590 = vcmp.ge.s32.totalorder %v16, 4
    %vm1591 = vcmp.lt.s32.totalorder %v13, 12
    %vm1592 = vcmp.lt.s32.totalorder %v14, 12
    %vm1593 = vcmp.lt.s32.totalorder %v15, 12
    %vm1594 = vcmp.lt.s32.totalorder %v16, 12
    %vm1595 = vmand %vm1587, %vm1591
    %vm1596 = vmand %vm1588, %vm1592
    %vm1597 = vmand %vm1589, %vm1593
    %vm1598 = vmand %vm1590, %vm1594
    %vm1599 = vcmp.ge.s32.totalorder %v13, 20
    %vm1600 = vcmp.ge.s32.totalorder %v14, 20
    %vm1601 = vcmp.ge.s32.totalorder %v15, 20
    %vm1602 = vcmp.ge.s32.totalorder %v16, 20
    %vm1603 = vcmp.lt.s32.totalorder %v13, 28
    %vm1604 = vcmp.lt.s32.totalorder %v14, 28
    %vm1605 = vcmp.lt.s32.totalorder %v15, 28
    %vm1606 = vcmp.lt.s32.totalorder %v16, 28
    %vm1607 = vmand %vm1599, %vm1603
    %vm1608 = vmand %vm1600, %vm1604
    %vm1609 = vmand %vm1601, %vm1605
    %vm1610 = vmand %vm1602, %vm1606
    %vm1611 = vmor %vm1595, %vm1607
    %vm1612 = vmor %vm1596, %vm1608
    %vm1613 = vmor %vm1597, %vm1609
    %vm1614 = vmor %vm1598, %vm1610
    %v1615 = vsub.s32 %v13, 4
    %v1616 = vsub.s32 %v14, 4
    %v1617 = vsub.s32 %v15, 4
    %v1618 = vsub.s32 %v16, 4
    %vm1619 = vcmp.eq.s32.totalorder %v18, %v1615
    %vm1620 = vcmp.eq.s32.totalorder %v18, %v1616
    %vm1621 = vcmp.eq.s32.totalorder %v18, %v1617
    %vm1622 = vcmp.eq.s32.totalorder %v18, %v1618
    %v1623 = vsel %vm1619, 1, 0
    %v1624 = vsel %vm1620, 1, 0
    %v1625 = vsel %vm1621, 1, 0
    %v1626 = vsel %vm1622, 1, 0
    %v1627 = vcvt.s32.f32 %v1623
    %v1628 = vcvt.s32.f32 %v1624
    %v1629 = vcvt.s32.f32 %v1625
    %v1630 = vcvt.s32.f32 %v1626
    %v1631 = vsel %vm1611, 1, 0
    %v1632 = vsel %vm1612, 1, 0
    %v1633 = vsel %vm1613, 1, 0
    %v1634 = vsel %vm1614, 1, 0
    %v1635 = vcvt.s32.f32 %v1631
    %v1636 = vcvt.s32.f32 %v1632
    %v1637 = vcvt.s32.f32 %v1633
    %v1638 = vcvt.s32.f32 %v1634
    %v1639 = vmul.f32 %v1627, %v1635
    %v1640 = vmul.f32 %v1628, %v1636
    %v1641 = vmul.f32 %v1629, %v1637
    %v1642 = vmul.f32 %v1630, %v1638
    %v1643 = vld [vmem:[%s1 + $0x1a8] sm:$0xff]
    %v1644 = vld [vmem:[%s1 + $0x1b0] sm:$0xff]
    %v1645 = vld [vmem:[%s1 + $0x1b8] sm:$0xff]
    %v1646 = vld [vmem:[%s1 + $0x1c0] sm:$0xff]
    %v1647 = vld [vmem:[%s1 + $0x2d0] sm:$0x1]
    %v1648 = vperm.slane %v1647, 0
    %v1650 = vsel %vm194, %v1568, 0
    %v1653 = vsel %vm194, %v1569, 0
    %v1656 = vsel %vm194, %v1570, 0
    %v1659 = vsel %vm194, %v1571, 0
    %1661 = vmatpush.msra.mxu0 0.0
    %1662 = vmatpush.msra.mxu0 0.0
    %1663 = vmatpush.msra.mxu0 0.0
    %1664 = vmatpush.msra.mxu0 0.0
    %1665 = vmatpush.msra.mxu0 0.0
    %1666 = vmatpush.msra.mxu0 0.0
    %1667 = vmatpush.msra.mxu0 0.0
    %1668 = vmatpush.msra.mxu0 0.0
    %1669 = vmatpush.msra.mxu0 0.0
    %1670 = vmatpush.msra.mxu0 0.0
    %1671 = vmatpush.msra.mxu0 0.0
    %1672 = vmatpush.msra.mxu0 0.0
    %1673 = vmatpush.msra.mxu0 %v1646
    %1674 = vmatpush.msra.mxu0 %v1645
    %1675 = vmatpush.msra.mxu0 %v1644
    %1676 = vmatpush.msra.mxu0 %v1643
    %1677 = vmatmul.f32.gmra.mxu0 %v1650
    %v1678 = vpop.f32.mrf.mxu0
    %v1679 = vadd.f32 %v1648, %v1678
    %1680 = vmatmul.f32.gmra.mxu0 %v1653
    %v1681 = vpop.f32.mrf.mxu0
    %v1682 = vadd.f32 %v1648, %v1681
    %1683 = vmatmul.f32.gmra.mxu0 %v1656
    %v1684 = vpop.f32.mrf.mxu0
    %v1685 = vadd.f32 %v1648, %v1684
    %1686 = vmatmul.f32.gmra.mxu0 %v1659
    %v1687 = vpop.f32.mrf.mxu0
    %v1688 = vadd.f32 %v1648, %v1687
    %1689 = vdwg.mxu0
    %1690 = vmatpush.msra.mxu0 0.0
    %1691 = vmatpush.msra.mxu0 0.0
    %1692 = vmatpush.msra.mxu0 0.0
    %1693 = vmatpush.msra.mxu0 0.0
    %1694 = vmatpush.msra.mxu0 0.0
    %1695 = vmatpush.msra.mxu0 0.0
    %1696 = vmatpush.msra.mxu0 0.0
    %1697 = vmatpush.msra.mxu0 0.0
    %1698 = vmatpush.msra.mxu0 0.0
    %1699 = vmatpush.msra.mxu0 0.0
    %1700 = vmatpush.msra.mxu0 0.0
    %1701 = vmatpush.msra.mxu0 0.0
    %1702 = vmatpush.msra.mxu0 %v1571
    %1703 = vmatpush.msra.mxu0 %v1570
    %1704 = vmatpush.msra.mxu0 %v1569
    %1705 = vmatpush.msra.mxu0 %v1568
    %1706 = vmatmul.f32.gmra.mxu0 %v1050
    %v1707 = vpop.f32.mrf.mxu0
    %v1708 = vadd.f32 0.0, %v1707
    %1709 = vmatmul.f32.gmra.mxu0 %v1053
    %v1710 = vpop.f32.mrf.mxu0
    %v1711 = vadd.f32 0.0, %v1710
    %1712 = vmatmul.f32.gmra.mxu0 %v1056
    %v1713 = vpop.f32.mrf.mxu0
    %v1714 = vadd.f32 0.0, %v1713
    %1715 = vmatmul.f32.gmra.mxu0 %v1059
    %v1716 = vpop.f32.mrf.mxu0
    %v1717 = vadd.f32 0.0, %v1716
    %1718 = vdwg.mxu0
    %v1719 = vld [vmem:[%s1 + $0x1c8] sm:$0xff]
    %v1720 = vld [vmem:[%s1 + $0x1d0] sm:$0xff]
    %v1721 = vld [vmem:[%s1 + $0x1d8] sm:$0xff]
    %v1722 = vld [vmem:[%s1 + $0x1e0] sm:$0xff]
    %v1724 = vsel %vm194, %v1708, 0
    %v1727 = vsel %vm194, %v1711, 0
    %v1730 = vsel %vm194, %v1714, 0
    %v1733 = vsel %vm194, %v1717, 0
    %1735 = vmatpush.msra.mxu0 0.0
    %1736 = vmatpush.msra.mxu0 0.0
    %1737 = vmatpush.msra.mxu0 0.0
    %1738 = vmatpush.msra.mxu0 0.0
    %1739 = vmatpush.msra.mxu0 0.0
    %1740 = vmatpush.msra.mxu0 0.0
    %1741 = vmatpush.msra.mxu0 0.0
    %1742 = vmatpush.msra.mxu0 0.0
    %1743 = vmatpush.msra.mxu0 0.0
    %1744 = vmatpush.msra.mxu0 0.0
    %1745 = vmatpush.msra.mxu0 0.0
    %1746 = vmatpush.msra.mxu0 0.0
    %1747 = vmatpush.msra.mxu0 %v1722
    %1748 = vmatpush.msra.mxu0 %v1721
    %1749 = vmatpush.msra.mxu0 %v1720
    %1750 = vmatpush.msra.mxu0 %v1719
    %1751 = vmatmul.f32.gmra.mxu0 %v1724
    %v1752 = vpop.f32.mrf.mxu0
    %v1753 = vadd.f32 0.0, %v1752
    %1754 = vmatmul.f32.gmra.mxu0 %v1727
    %v1755 = vpop.f32.mrf.mxu0
    %v1756 = vadd.f32 0.0, %v1755
    %1757 = vmatmul.f32.gmra.mxu0 %v1730
    %v1758 = vpop.f32.mrf.mxu0
    %v1759 = vadd.f32 0.0, %v1758
    %1760 = vmatmul.f32.gmra.mxu0 %v1733
    %v1761 = vpop.f32.mrf.mxu0
    %v1762 = vadd.f32 0.0, %v1761
    %1763 = vdwg.mxu0
    %v1764 = vadd.f32 %v1679, %v1753
    %v1765 = vadd.f32 %v1682, %v1756
    %v1766 = vadd.f32 %v1685, %v1759
    %v1767 = vadd.f32 %v1688, %v1762
    %v1769 = vsel %vm194, %v1583, 0
    %v1772 = vsel %vm194, %v1584, 0
    %v1775 = vsel %vm194, %v1585, 0
    %v1778 = vsel %vm194, %v1586, 0
    %1780 = vmatpush.msra.mxu0 0.0
    %1781 = vmatpush.msra.mxu0 0.0
    %1782 = vmatpush.msra.mxu0 0.0
    %1783 = vmatpush.msra.mxu0 0.0
    %1784 = vmatpush.msra.mxu0 0.0
    %1785 = vmatpush.msra.mxu0 0.0
    %1786 = vmatpush.msra.mxu0 0.0
    %1787 = vmatpush.msra.mxu0 0.0
    %1788 = vmatpush.msra.mxu0 0.0
    %1789 = vmatpush.msra.mxu0 0.0
    %1790 = vmatpush.msra.mxu0 0.0
    %1791 = vmatpush.msra.mxu0 0.0
    %1792 = vmatpush.msra.mxu0 %v1571
    %1793 = vmatpush.msra.mxu0 %v1570
    %1794 = vmatpush.msra.mxu0 %v1569
    %1795 = vmatpush.msra.mxu0 %v1568
    %1796 = vmatmul.f32.gmra.mxu0 %v1769
    %v1797 = vpop.f32.mrf.mxu0
    %v1798 = vadd.f32 0.0, %v1797
    %1799 = vmatmul.f32.gmra.mxu0 %v1772
    %v1800 = vpop.f32.mrf.mxu0
    %v1801 = vadd.f32 0.0, %v1800
    %1802 = vmatmul.f32.gmra.mxu0 %v1775
    %v1803 = vpop.f32.mrf.mxu0
    %v1804 = vadd.f32 0.0, %v1803
    %1805 = vmatmul.f32.gmra.mxu0 %v1778
    %v1806 = vpop.f32.mrf.mxu0
    %v1807 = vadd.f32 0.0, %v1806
    %1808 = vdwg.mxu0
    %v1809 = vld [vmem:[%s1 + $0x1e8] sm:$0xff]
    %v1810 = vld [vmem:[%s1 + $0x1f0] sm:$0xff]
    %v1811 = vld [vmem:[%s1 + $0x1f8] sm:$0xff]
    %v1812 = vld [vmem:[%s1 + $0x200] sm:$0xff]
    %v1814 = vsel %vm194, %v1798, 0
    %v1817 = vsel %vm194, %v1801, 0
    %v1820 = vsel %vm194, %v1804, 0
    %v1823 = vsel %vm194, %v1807, 0
    %1825 = vmatpush.msra.mxu0 0.0
    %1826 = vmatpush.msra.mxu0 0.0
    %1827 = vmatpush.msra.mxu0 0.0
    %1828 = vmatpush.msra.mxu0 0.0
    %1829 = vmatpush.msra.mxu0 0.0
    %1830 = vmatpush.msra.mxu0 0.0
    %1831 = vmatpush.msra.mxu0 0.0
    %1832 = vmatpush.msra.mxu0 0.0
    %1833 = vmatpush.msra.mxu0 0.0
    %1834 = vmatpush.msra.mxu0 0.0
    %1835 = vmatpush.msra.mxu0 0.0
    %1836 = vmatpush.msra.mxu0 0.0
    %1837 = vmatpush.msra.mxu0 %v1812
    %1838 = vmatpush.msra.mxu0 %v1811
    %1839 = vmatpush.msra.mxu0 %v1810
    %1840 = vmatpush.msra.mxu0 %v1809
    %1841 = vmatmul.f32.gmra.mxu0 %v1814
    %v1842 = vpop.f32.mrf.mxu0
    %v1843 = vadd.f32 0.0, %v1842
    %1844 = vmatmul.f32.gmra.mxu0 %v1817
    %v1845 = vpop.f32.mrf.mxu0
    %v1846 = vadd.f32 0.0, %v1845
    %1847 = vmatmul.f32.gmra.mxu0 %v1820
    %v1848 = vpop.f32.mrf.mxu0
    %v1849 = vadd.f32 0.0, %v1848
    %1850 = vmatmul.f32.gmra.mxu0 %v1823
    %v1851 = vpop.f32.mrf.mxu0
    %v1852 = vadd.f32 0.0, %v1851
    %1853 = vdwg.mxu0
    %v1854 = vadd.f32 %v1764, %v1843
    %v1855 = vadd.f32 %v1765, %v1846
    %v1856 = vadd.f32 %v1766, %v1849
    %v1857 = vadd.f32 %v1767, %v1852
    %v1858 = vmax.f32 %v1854, 0.0
    %v1859 = vmax.f32 %v1855, 0.0
    %v1860 = vmax.f32 %v1856, 0.0
    %v1861 = vmax.f32 %v1857, 0.0
    %v1863 = vsel %vm194, %v1639, 0
    %v1866 = vsel %vm194, %v1640, 0
    %v1869 = vsel %vm194, %v1641, 0
    %v1872 = vsel %vm194, %v1642, 0
    %1874 = vmatpush.msra.mxu0 0.0
    %1875 = vmatpush.msra.mxu0 0.0
    %1876 = vmatpush.msra.mxu0 0.0
    %1877 = vmatpush.msra.mxu0 0.0
    %1878 = vmatpush.msra.mxu0 0.0
    %1879 = vmatpush.msra.mxu0 0.0
    %1880 = vmatpush.msra.mxu0 0.0
    %1881 = vmatpush.msra.mxu0 0.0
    %1882 = vmatpush.msra.mxu0 0.0
    %1883 = vmatpush.msra.mxu0 0.0
    %1884 = vmatpush.msra.mxu0 0.0
    %1885 = vmatpush.msra.mxu0 0.0
    %1886 = vmatpush.msra.mxu0 %v1861
    %1887 = vmatpush.msra.mxu0 %v1860
    %1888 = vmatpush.msra.mxu0 %v1859
    %1889 = vmatpush.msra.mxu0 %v1858
    %1890 = vmatmul.f32.gmra.mxu0 %v1863
    %v1891 = vpop.f32.mrf.mxu0
    %v1892 = vadd.f32 0.0, %v1891
    %1893 = vmatmul.f32.gmra.mxu0 %v1866
    %v1894 = vpop.f32.mrf.mxu0
    %v1895 = vadd.f32 0.0, %v1894
    %1896 = vmatmul.f32.gmra.mxu0 %v1869
    %v1897 = vpop.f32.mrf.mxu0
    %v1898 = vadd.f32 0.0, %v1897
    %1899 = vmatmul.f32.gmra.mxu0 %v1872
    %v1900 = vpop.f32.mrf.mxu0
    %v1901 = vadd.f32 0.0, %v1900
    %1902 = vdwg.mxu0
    %1903 = vmatpush.msra.mxu0 0.0
    %1904 = vmatpush.msra.mxu0 0.0
    %1905 = vmatpush.msra.mxu0 0.0
    %1906 = vmatpush.msra.mxu0 0.0
    %1907 = vmatpush.msra.mxu0 0.0
    %1908 = vmatpush.msra.mxu0 0.0
    %1909 = vmatpush.msra.mxu0 0.0
    %1910 = vmatpush.msra.mxu0 0.0
    %1911 = vmatpush.msra.mxu0 0.0
    %1912 = vmatpush.msra.mxu0 0.0
    %1913 = vmatpush.msra.mxu0 0.0
    %1914 = vmatpush.msra.mxu0 0.0
    %1915 = vmatpush.msra.mxu0 %v1901
    %1916 = vmatpush.msra.mxu0 %v1898
    %1917 = vmatpush.msra.mxu0 %v1895
    %1918 = vmatpush.msra.mxu0 %v1892
    %1919 = vmatmul.f32.gmra.mxu0 %v462
    %v1920 = vpop.f32.mrf.mxu0
    %v1921 = vadd.f32 0.0, %v1920
    %1922 = vdwg.mxu0
    %v1923 = vmul.f32 %v1892, %v1892
    %v1924 = vmul.f32 %v1895, %v1895
    %v1925 = vmul.f32 %v1898, %v1898
    %v1926 = vmul.f32 %v1901, %v1901
    %1927 = vmatpush.msra.mxu0 0.0
    %1928 = vmatpush.msra.mxu0 0.0
    %1929 = vmatpush.msra.mxu0 0.0
    %1930 = vmatpush.msra.mxu0 0.0
    %1931 = vmatpush.msra.mxu0 0.0
    %1932 = vmatpush.msra.mxu0 0.0
    %1933 = vmatpush.msra.mxu0 0.0
    %1934 = vmatpush.msra.mxu0 0.0
    %1935 = vmatpush.msra.mxu0 0.0
    %1936 = vmatpush.msra.mxu0 0.0
    %1937 = vmatpush.msra.mxu0 0.0
    %1938 = vmatpush.msra.mxu0 0.0
    %1939 = vmatpush.msra.mxu0 %v1926
    %1940 = vmatpush.msra.mxu0 %v1925
    %1941 = vmatpush.msra.mxu0 %v1924
    %1942 = vmatpush.msra.mxu0 %v1923
    %1943 = vmatmul.f32.gmra.mxu0 %v462
    %v1944 = vpop.f32.mrf.mxu0
    %v1945 = vadd.f32 0.0, %v1944
    %1946 = vdwg.mxu0
    %v1947 = vmul.f32 %v1921, 0.03125
    %v1948 = vmul.f32 %v1945, 0.03125
    %v1949 = vmul.f32 %v1947, %v1947
    %v1950 = vsub.f32 %v1948, %v1949
    %v1951 = vmax.f32 %v1950, 0.0
    %v1952 = vadd.f32 %v1951, 1e-05
    %v1953 = vrsqrt.pop %v1952
    %v1954 = vmul.f32 %v1953, %v1952
    %v1955 = vmul.f32 %v1954, %v1953
    %v1956 = vmul.f32 0.5, %v1955
    %v1957 = vsub.f32 1.5, %v1956
    %v1958 = vmul.f32 %v1953, %v1957
    %vm1959 = vweird.f32 %v1952
    %vm1960 = vweird.f32 %v1953
    %vm1961 = vmor %vm1959, %vm1960
    %v1962 = vsel %vm1961, %v1953, %v1958
    %v1963 = vperm.slane %v1947, 0
    %v1964 = vsub.f32 %v1892, %v1963
    %v1965 = vsub.f32 %v1895, %v1963
    %v1966 = vsub.f32 %v1898, %v1963
    %v1967 = vsub.f32 %v1901, %v1963
    %v1968 = vperm.slane %v1962, 0
    %v1969 = vmul.f32 %v1964, %v1968
    %v1970 = vmul.f32 %v1965, %v1968
    %v1971 = vmul.f32 %v1966, %v1968
    %v1972 = vmul.f32 %v1967, %v1968
    %v1973 = vld [vmem:[%s1 + $0x208] sm:$0xff]
    %v1974 = vld [vmem:[%s1 + $0x210] sm:$0xff]
    %v1975 = vld [vmem:[%s1 + $0x218] sm:$0xff]
    %v1976 = vld [vmem:[%s1 + $0x220] sm:$0xff]
    %v1977 = vld [vmem:[%s1 + $0x2d8] sm:$0x1]
    %v1978 = vperm.slane %v1977, 0
    %v1980 = vsel %vm194, %v1969, 0
    %v1983 = vsel %vm194, %v1970, 0
    %v1986 = vsel %vm194, %v1971, 0
    %v1989 = vsel %vm194, %v1972, 0
    %1991 = vmatpush.msra.mxu0 0.0
    %1992 = vmatpush.msra.mxu0 0.0
    %1993 = vmatpush.msra.mxu0 0.0
    %1994 = vmatpush.msra.mxu0 0.0
    %1995 = vmatpush.msra.mxu0 0.0
    %1996 = vmatpush.msra.mxu0 0.0
    %1997 = vmatpush.msra.mxu0 0.0
    %1998 = vmatpush.msra.mxu0 0.0
    %1999 = vmatpush.msra.mxu0 0.0
    %2000 = vmatpush.msra.mxu0 0.0
    %2001 = vmatpush.msra.mxu0 0.0
    %2002 = vmatpush.msra.mxu0 0.0
    %2003 = vmatpush.msra.mxu0 %v1976
    %2004 = vmatpush.msra.mxu0 %v1975
    %2005 = vmatpush.msra.mxu0 %v1974
    %2006 = vmatpush.msra.mxu0 %v1973
    %2007 = vmatmul.f32.gmra.mxu0 %v1980
    %v2008 = vpop.f32.mrf.mxu0
    %v2009 = vadd.f32 %v1978, %v2008
    %2010 = vmatmul.f32.gmra.mxu0 %v1983
    %v2011 = vpop.f32.mrf.mxu0
    %v2012 = vadd.f32 %v1978, %v2011
    %2013 = vmatmul.f32.gmra.mxu0 %v1986
    %v2014 = vpop.f32.mrf.mxu0
    %v2015 = vadd.f32 %v1978, %v2014
    %2016 = vmatmul.f32.gmra.mxu0 %v1989
    %v2017 = vpop.f32.mrf.mxu0
    %v2018 = vadd.f32 %v1978, %v2017
    %2019 = vdwg.mxu0
    %2020 = vmatpush.msra.mxu0 0.0
    %2021 = vmatpush.msra.mxu0 0.0
    %2022 = vmatpush.msra.mxu0 0.0
    %2023 = vmatpush.msra.mxu0 0.0
    %2024 = vmatpush.msra.mxu0 0.0
    %2025 = vmatpush.msra.mxu0 0.0
    %2026 = vmatpush.msra.mxu0 0.0
    %2027 = vmatpush.msra.mxu0 0.0
    %2028 = vmatpush.msra.mxu0 0.0
    %2029 = vmatpush.msra.mxu0 0.0
    %2030 = vmatpush.msra.mxu0 0.0
    %2031 = vmatpush.msra.mxu0 0.0
    %2032 = vmatpush.msra.mxu0 %v1972
    %2033 = vmatpush.msra.mxu0 %v1971
    %2034 = vmatpush.msra.mxu0 %v1970
    %2035 = vmatpush.msra.mxu0 %v1969
    %2036 = vmatmul.f32.gmra.mxu0 %v1050
    %v2037 = vpop.f32.mrf.mxu0
    %v2038 = vadd.f32 0.0, %v2037
    %2039 = vmatmul.f32.gmra.mxu0 %v1053
    %v2040 = vpop.f32.mrf.mxu0
    %v2041 = vadd.f32 0.0, %v2040
    %2042 = vmatmul.f32.gmra.mxu0 %v1056
    %v2043 = vpop.f32.mrf.mxu0
    %v2044 = vadd.f32 0.0, %v2043
    %2045 = vmatmul.f32.gmra.mxu0 %v1059
    %v2046 = vpop.f32.mrf.mxu0
    %v2047 = vadd.f32 0.0, %v2046
    %2048 = vdwg.mxu0
    %v2049 = vld [vmem:[%s1 + $0x228] sm:$0xff]
    %v2050 = vld [vmem:[%s1 + $0x230] sm:$0xff]
    %v2051 = vld [vmem:[%s1 + $0x238] sm:$0xff]
    %v2052 = vld [vmem:[%s1 + $0x240] sm:$0xff]
    %v2054 = vsel %vm194, %v2038, 0
    %v2057 = vsel %vm194, %v2041, 0
    %v2060 = vsel %vm194, %v2044, 0
    %v2063 = vsel %vm194, %v2047, 0
    %2065 = vmatpush.msra.mxu0 0.0
    %2066 = vmatpush.msra.mxu0 0.0
    %2067 = vmatpush.msra.mxu0 0.0
    %2068 = vmatpush.msra.mxu0 0.0
    %2069 = vmatpush.msra.mxu0 0.0
    %2070 = vmatpush.msra.mxu0 0.0
    %2071 = vmatpush.msra.mxu0 0.0
    %2072 = vmatpush.msra.mxu0 0.0
    %2073 = vmatpush.msra.mxu0 0.0
    %2074 = vmatpush.msra.mxu0 0.0
    %2075 = vmatpush.msra.mxu0 0.0
    %2076 = vmatpush.msra.mxu0 0.0
    %2077 = vmatpush.msra.mxu0 %v2052
    %2078 = vmatpush.msra.mxu0 %v2051
    %2079 = vmatpush.msra.mxu0 %v2050
    %2080 = vmatpush.msra.mxu0 %v2049
    %2081 = vmatmul.f32.gmra.mxu0 %v2054
    %v2082 = vpop.f32.mrf.mxu0
    %v2083 = vadd.f32 0.0, %v2082
    %2084 = vmatmul.f32.gmra.mxu0 %v2057
    %v2085 = vpop.f32.mrf.mxu0
    %v2086 = vadd.f32 0.0, %v2085
    %2087 = vmatmul.f32.gmra.mxu0 %v2060
    %v2088 = vpop.f32.mrf.mxu0
    %v2089 = vadd.f32 0.0, %v2088
    %2090 = vmatmul.f32.gmra.mxu0 %v2063
    %v2091 = vpop.f32.mrf.mxu0
    %v2092 = vadd.f32 0.0, %v2091
    %2093 = vdwg.mxu0
    %v2094 = vadd.f32 %v2009, %v2083
    %v2095 = vadd.f32 %v2012, %v2086
    %v2096 = vadd.f32 %v2015, %v2089
    %v2097 = vadd.f32 %v2018, %v2092
    %2098 = vmatpush.msra.mxu0 0.0
    %2099 = vmatpush.msra.mxu0 0.0
    %2100 = vmatpush.msra.mxu0 0.0
    %2101 = vmatpush.msra.mxu0 0.0
    %2102 = vmatpush.msra.mxu0 0.0
    %2103 = vmatpush.msra.mxu0 0.0
    %2104 = vmatpush.msra.mxu0 0.0
    %2105 = vmatpush.msra.mxu0 0.0
    %2106 = vmatpush.msra.mxu0 0.0
    %2107 = vmatpush.msra.mxu0 0.0
    %2108 = vmatpush.msra.mxu0 0.0
    %2109 = vmatpush.msra.mxu0 0.0
    %2110 = vmatpush.msra.mxu0 %v1972
    %2111 = vmatpush.msra.mxu0 %v1971
    %2112 = vmatpush.msra.mxu0 %v1970
    %2113 = vmatpush.msra.mxu0 %v1969
    %2114 = vmatmul.f32.gmra.mxu0 %v1769
    %v2115 = vpop.f32.mrf.mxu0
    %v2116 = vadd.f32 0.0, %v2115
    %2117 = vmatmul.f32.gmra.mxu0 %v1772
    %v2118 = vpop.f32.mrf.mxu0
    %v2119 = vadd.f32 0.0, %v2118
    %2120 = vmatmul.f32.gmra.mxu0 %v1775
    %v2121 = vpop.f32.mrf.mxu0
    %v2122 = vadd.f32 0.0, %v2121
    %2123 = vmatmul.f32.gmra.mxu0 %v1778
    %v2124 = vpop.f32.mrf.mxu0
    %v2125 = vadd.f32 0.0, %v2124
    %2126 = vdwg.mxu0
    %v2127 = vld [vmem:[%s1 + $0x248] sm:$0xff]
    %v2128 = vld [vmem:[%s1 + $0x250] sm:$0xff]
    %v2129 = vld [vmem:[%s1 + $0x258] sm:$0xff]
    %v2130 = vld [vmem:[%s1 + $0x260] sm:$0xff]
    %v2132 = vsel %vm194, %v2116, 0
    %v2135 = vsel %vm194, %v2119, 0
    %v2138 = vsel %vm194, %v2122, 0
    %v2141 = vsel %vm194, %v2125, 0
    %2143 = vmatpush.msra.mxu0 0.0
    %2144 = vmatpush.msra.mxu0 0.0
    %2145 = vmatpush.msra.mxu0 0.0
    %2146 = vmatpush.msra.mxu0 0.0
    %2147 = vmatpush.msra.mxu0 0.0
    %2148 = vmatpush.msra.mxu0 0.0
    %2149 = vmatpush.msra.mxu0 0.0
    %2150 = vmatpush.msra.mxu0 0.0
    %2151 = vmatpush.msra.mxu0 0.0
    %2152 = vmatpush.msra.mxu0 0.0
    %2153 = vmatpush.msra.mxu0 0.0
    %2154 = vmatpush.msra.mxu0 0.0
    %2155 = vmatpush.msra.mxu0 %v2130
    %2156 = vmatpush.msra.mxu0 %v2129
    %2157 = vmatpush.msra.mxu0 %v2128
    %2158 = vmatpush.msra.mxu0 %v2127
    %2159 = vmatmul.f32.gmra.mxu0 %v2132
    %v2160 = vpop.f32.mrf.mxu0
    %v2161 = vadd.f32 0.0, %v2160
    %2162 = vmatmul.f32.gmra.mxu0 %v2135
    %v2163 = vpop.f32.mrf.mxu0
    %v2164 = vadd.f32 0.0, %v2163
    %2165 = vmatmul.f32.gmra.mxu0 %v2138
    %v2166 = vpop.f32.mrf.mxu0
    %v2167 = vadd.f32 0.0, %v2166
    %2168 = vmatmul.f32.gmra.mxu0 %v2141
    %v2169 = vpop.f32.mrf.mxu0
    %v2170 = vadd.f32 0.0, %v2169
    %2171 = vdwg.mxu0
    %v2172 = vadd.f32 %v2094, %v2161
    %v2173 = vadd.f32 %v2095, %v2164
    %v2174 = vadd.f32 %v2096, %v2167
    %v2175 = vadd.f32 %v2097, %v2170
    %v2176 = vmax.f32 %v2172, 0.0
    %v2177 = vmax.f32 %v2173, 0.0
    %v2178 = vmax.f32 %v2174, 0.0
    %v2179 = vmax.f32 %v2175, 0.0
    %2180 = vmatpush.msra.mxu0 0.0
    %2181 = vmatpush.msra.mxu0 0.0
    %2182 = vmatpush.msra.mxu0 0.0
    %2183 = vmatpush.msra.mxu0 0.0
    %2184 = vmatpush.msra.mxu0 0.0
    %2185 = vmatpush.msra.mxu0 0.0
    %2186 = vmatpush.msra.mxu0 0.0
    %2187 = vmatpush.msra.mxu0 0.0
    %2188 = vmatpush.msra.mxu0 0.0
    %2189 = vmatpush.msra.mxu0 0.0
    %2190 = vmatpush.msra.mxu0 0.0
    %2191 = vmatpush.msra.mxu0 0.0
    %2192 = vmatpush.msra.mxu0 %v2179
    %2193 = vmatpush.msra.mxu0 %v2178
    %2194 = vmatpush.msra.mxu0 %v2177
    %2195 = vmatpush.msra.mxu0 %v2176
    %2196 = vmatmul.f32.gmra.mxu0 %v1863
    %v2197 = vpop.f32.mrf.mxu0
    %v2198 = vadd.f32 0.0, %v2197
    %2199 = vmatmul.f32.gmra.mxu0 %v1866
    %v2200 = vpop.f32.mrf.mxu0
    %v2201 = vadd.f32 0.0, %v2200
    %2202 = vmatmul.f32.gmra.mxu0 %v1869
    %v2203 = vpop.f32.mrf.mxu0
    %v2204 = vadd.f32 0.0, %v2203
    %2205 = vmatmul.f32.gmra.mxu0 %v1872
    %v2206 = vpop.f32.mrf.mxu0
    %v2207 = vadd.f32 0.0, %v2206
    %2208 = vdwg.mxu0
    %v2209 = vld [vmem:[%s1 + $0x2f0] sm:$0x1]
    %v2210 = vld [vmem:[%s1 + $0x308] sm:$0x1]
    %2211 = vmatpush.msra.mxu0 0.0
    %2212 = vmatpush.msra.mxu0 0.0
    %2213 = vmatpush.msra.mxu0 0.0
    %2214 = vmatpush.msra.mxu0 0.0
    %2215 = vmatpush.msra.mxu0 0.0
    %2216 = vmatpush.msra.mxu0 0.0
    %2217 = vmatpush.msra.mxu0 0.0
    %2218 = vmatpush.msra.mxu0 0.0
    %2219 = vmatpush.msra.mxu0 0.0
    %2220 = vmatpush.msra.mxu0 0.0
    %2221 = vmatpush.msra.mxu0 0.0
    %2222 = vmatpush.msra.mxu0 0.0
    %2223 = vmatpush.msra.mxu0 %v2207
    %2224 = vmatpush.msra.mxu0 %v2204
    %2225 = vmatpush.msra.mxu0 %v2201
    %2226 = vmatpush.msra.mxu0 %v2198
    %2227 = vmatmul.f32.gmra.mxu0 %v462
    %v2228 = vpop.f32.mrf.mxu0
    %v2229 = vadd.f32 0.0, %v2228
    %2230 = vdwg.mxu0
    %v2231 = vmul.f32 %v2198, %v2198
    %v2232 = vmul.f32 %v2201, %v2201
    %v2233 = vmul.f32 %v2204, %v2204
    %v2234 = vmul.f32 %v2207, %v2207
    %2235 = vmatpush.msra.mxu0 0.0
    %2236 = vmatpush.msra.mxu0 0.0
    %2237 = vmatpush.msra.mxu0 0.0
    %2238 = vmatpush.msra.mxu0 0.0
    %2239 = vmatpush.msra.mxu0 0.0
    %2240 = vmatpush.msra.mxu0 0.0
    %2241 = vmatpush.msra.mxu0 0.0
    %2242 = vmatpush.msra.mxu0 0.0
    %2243 = vmatpush.msra.mxu0 0.0
    %2244 = vmatpush.msra.mxu0 0.0
    %2245 = vmatpush.msra.mxu0 0.0
    %2246 = vmatpush.msra.mxu0 0.0
    %2247 = vmatpush.msra.mxu0 %v2234
    %2248 = vmatpush.msra.mxu0 %v2233
    %2249 = vmatpush.msra.mxu0 %v2232
    %2250 = vmatpush.msra.mxu0 %v2231
    %2251 = vmatmul.f32.gmra.mxu0 %v462
    %v2252 = vpop.f32.mrf.mxu0
    %v2253 = vadd.f32 0.0, %v2252
    %2254 = vdwg.mxu0
    %v2255 = vmul.f32 %v2229, 0.03125
    %v2256 = vmul.f32 %v2253, 0.03125
    %v2257 = vmul.f32 %v2255, %v2255
    %v2258 = vsub.f32 %v2256, %v2257
    %v2259 = vmax.f32 %v2258, 0.0
    %v2260 = vadd.f32 %v2259, 1e-05
    %v2261 = vrsqrt.pop %v2260
    %v2262 = vmul.f32 %v2261, %v2260
    %v2263 = vmul.f32 %v2262, %v2261
    %v2264 = vmul.f32 0.5, %v2263
    %v2265 = vsub.f32 1.5, %v2264
    %v2266 = vmul.f32 %v2261, %v2265
    %vm2267 = vweird.f32 %v2260
    %vm2268 = vweird.f32 %v2261
    %vm2269 = vmor %vm2267, %vm2268
    %v2270 = vsel %vm2269, %v2261, %v2266
    %v2271 = vperm.slane %v2255, 0
    %v2272 = vsub.f32 %v2198, %v2271
    %v2273 = vsub.f32 %v2201, %v2271
    %v2274 = vsub.f32 %v2204, %v2271
    %v2275 = vsub.f32 %v2207, %v2271
    %v2276 = vmul.f32 %v2270, %v2209
    %v2277 = vperm.slane %v2276, 0
    %v2278 = vmul.f32 %v2272, %v2277
    %v2279 = vmul.f32 %v2273, %v2277
    %v2280 = vmul.f32 %v2274, %v2277
    %v2281 = vmul.f32 %v2275, %v2277
    %v2282 = vperm.slane %v2210, 0
    %v2283 = vadd.f32 %v2278, %v2282
    %v2284 = vadd.f32 %v2279, %v2282
    %v2285 = vadd.f32 %v2280, %v2282
    %v2286 = vadd.f32 %v2281, %v2282
    %v2287 = vadd.f32 %v1568, %v2283
    %v2288 = vadd.f32 %v1569, %v2284
    %v2289 = vadd.f32 %v1570, %v2285
    %v2290 = vadd.f32 %v1571, %v2286
    %v2291 = vld [vmem:[%s1 + $0x268] sm:$0xff]
    %v2292 = vld [vmem:[%s1 + $0x270] sm:$0xff]
    %v2293 = vld [vmem:[%s1 + $0x278] sm:$0xff]
    %v2294 = vld [vmem:[%s1 + $0x280] sm:$0xff]
    %v2295 = vld [vmem:[%s1 + $0x310] sm:$0x1]
    %v2296 = vperm.slane %v2295, 0
    %v2298 = vsel %vm194, %v2287, 0
    %v2301 = vsel %vm194, %v2288, 0
    %v2304 = vsel %vm194, %v2289, 0
    %v2307 = vsel %vm194, %v2290, 0
    %2309 = vmatpush.msra.mxu0 0.0
    %2310 = vmatpush.msra.mxu0 0.0
    %2311 = vmatpush.msra.mxu0 0.0
    %2312 = vmatpush.msra.mxu0 0.0
    %2313 = vmatpush.msra.mxu0 0.0
    %2314 = vmatpush.msra.mxu0 0.0
    %2315 = vmatpush.msra.mxu0 0.0
    %2316 = vmatpush.msra.mxu0 0.0
    %2317 = vmatpush.msra.mxu0 0.0
    %2318 = vmatpush.msra.mxu0 0.0
    %2319 = vmatpush.msra.mxu0 0.0
    %2320 = vmatpush.msra.mxu0 0.0
    %2321 = vmatpush.msra.mxu0 %v2294
    %2322 = vmatpush.msra.mxu0 %v2293
    %2323 = vmatpush.msra.mxu0 %v2292
    %2324 = vmatpush.msra.mxu0 %v2291
    %2325 = vmatmul.f32.gmra.mxu0 %v2298
    %v2326 = vpop.f32.mrf.mxu0
    %v2327 = vadd.f32 %v2296, %v2326
    %2328 = vmatmul.f32.gmra.mxu0 %v2301
    %v2329 = vpop.f32.mrf.mxu0
    %v2330 = vadd.f32 %v2296, %v2329
    %2331 = vmatmul.f32.gmra.mxu0 %v2304
    %v2332 = vpop.f32.mrf.mxu0
    %v2333 = vadd.f32 %v2296, %v2332
    %2334 = vmatmul.f32.gmra.mxu0 %v2307
    %v2335 = vpop.f32.mrf.mxu0
    %v2336 = vadd.f32 %v2296, %v2335
    %2337 = vdwg.mxu0
    %v2338 = vadd.f32 %v2327, %v96
    %v2339 = vadd.f32 %v2330, %v97
    %v2340 = vadd.f32 %v2333, %v98
    %v2341 = vadd.f32 %v2336, %v99
    %v2342 = vmax.f32 %v2338, 0.0
    %v2343 = vmax.f32 %v2339, 0.0
    %v2344 = vmax.f32 %v2340, 0.0
    %v2345 = vmax.f32 %v2341, 0.0
    %2346 = vmatpush.msra.mxu0 0.0
    %2347 = vmatpush.msra.mxu0 0.0
    %2348 = vmatpush.msra.mxu0 0.0
    %2349 = vmatpush.msra.mxu0 0.0
    %2350 = vmatpush.msra.mxu0 0.0
    %2351 = vmatpush.msra.mxu0 0.0
    %2352 = vmatpush.msra.mxu0 0.0
    %2353 = vmatpush.msra.mxu0 0.0
    %2354 = vmatpush.msra.mxu0 0.0
    %2355 = vmatpush.msra.mxu0 0.0
    %2356 = vmatpush.msra.mxu0 0.0
    %2357 = vmatpush.msra.mxu0 0.0
    %2358 = vmatpush.msra.mxu0 %v2345
    %2359 = vmatpush.msra.mxu0 %v2344
    %2360 = vmatpush.msra.mxu0 %v2343
    %2361 = vmatpush.msra.mxu0 %v2342
    %2362 = vmatmul.f32.gmra.mxu0 %v462
    %v2363 = vpop.f32.mrf.mxu0
    %v2364 = vadd.f32 0.0, %v2363
    %2365 = vdwg.mxu0
    %v2366 = vmul.f32 %v2342, %v2342
    %v2367 = vmul.f32 %v2343, %v2343
    %v2368 = vmul.f32 %v2344, %v2344
    %v2369 = vmul.f32 %v2345, %v2345
    %2370 = vmatpush.msra.mxu0 0.0
    %2371 = vmatpush.msra.mxu0 0.0
    %2372 = vmatpush.msra.mxu0 0.0
    %2373 = vmatpush.msra.mxu0 0.0
    %2374 = vmatpush.msra.mxu0 0.0
    %2375 = vmatpush.msra.mxu0 0.0
    %2376 = vmatpush.msra.mxu0 0.0
    %2377 = vmatpush.msra.mxu0 0.0
    %2378 = vmatpush.msra.mxu0 0.0
    %2379 = vmatpush.msra.mxu0 0.0
    %2380 = vmatpush.msra.mxu0 0.0
    %2381 = vmatpush.msra.mxu0 0.0
    %2382 = vmatpush.msra.mxu0 %v2369
    %2383 = vmatpush.msra.mxu0 %v2368
    %2384 = vmatpush.msra.mxu0 %v2367
    %2385 = vmatpush.msra.mxu0 %v2366
    %2386 = vmatmul.f32.gmra.mxu0 %v462
    %v2387 = vpop.f32.mrf.mxu0
    %v2388 = vadd.f32 0.0, %v2387
    %2389 = vdwg.mxu0
    %v2390 = vmul.f32 %v2364, 0.03125
    %v2391 = vmul.f32 %v2388, 0.03125
    %v2392 = vmul.f32 %v2390, %v2390
    %v2393 = vsub.f32 %v2391, %v2392
    %v2394 = vmax.f32 %v2393, 0.0
    %v2395 = vadd.f32 %v2394, 1e-05
    %v2396 = vrsqrt.pop %v2395
    %v2397 = vmul.f32 %v2396, %v2395
    %v2398 = vmul.f32 %v2397, %v2396
    %v2399 = vmul.f32 0.5, %v2398
    %v2400 = vsub.f32 1.5, %v2399
    %v2401 = vmul.f32 %v2396, %v2400
    %vm2402 = vweird.f32 %v2395
    %vm2403 = vweird.f32 %v2396
    %vm2404 = vmor %vm2402, %vm2403
    %v2405 = vsel %vm2404, %v2396, %v2401
    %v2406 = vperm.slane %v2390, 0
    %v2407 = vsub.f32 %v2342, %v2406
    %v2408 = vsub.f32 %v2343, %v2406
    %v2409 = vsub.f32 %v2344, %v2406
    %v2410 = vsub.f32 %v2345, %v2406
    %v2411 = vperm.slane %v2405, 0
    %v2412 = vmul.f32 %v2407, %v2411
    %v2413 = vmul.f32 %v2408, %v2411
    %v2414 = vmul.f32 %v2409, %v2411
    %v2415 = vmul.f32 %v2410, %v2411
    %v2416 = vld [vmem:[%s1 + $0x288] sm:$0xff]
    %v2417 = vld [vmem:[%s1 + $0x290] sm:$0xff]
    %v2418 = vld [vmem:[%s1 + $0x298] sm:$0xff]
    %v2419 = vld [vmem:[%s1 + $0x2a0] sm:$0xff]
    %v2420 = vld [vmem:[%s1 + $0x318] sm:$0x1]
    %v2421 = vperm.slane %v2420, 0
    %v2423 = vsel %vm194, %v2412, 0
    %v2426 = vsel %vm194, %v2413, 0
    %v2429 = vsel %vm194, %v2414, 0
    %v2432 = vsel %vm194, %v2415, 0
    %2434 = vmatpush.msra.mxu0 0.0
    %2435 = vmatpush.msra.mxu0 0.0
    %2436 = vmatpush.msra.mxu0 0.0
    %2437 = vmatpush.msra.mxu0 0.0
    %2438 = vmatpush.msra.mxu0 0.0
    %2439 = vmatpush.msra.mxu0 0.0
    %2440 = vmatpush.msra.mxu0 0.0
    %2441 = vmatpush.msra.mxu0 0.0
    %2442 = vmatpush.msra.mxu0 0.0
    %2443 = vmatpush.msra.mxu0 0.0
    %2444 = vmatpush.msra.mxu0 0.0
    %2445 = vmatpush.msra.mxu0 0.0
    %2446 = vmatpush.msra.mxu0 %v2419
    %2447 = vmatpush.msra.mxu0 %v2418
    %2448 = vmatpush.msra.mxu0 %v2417
    %2449 = vmatpush.msra.mxu0 %v2416
    %2450 = vmatmul.f32.gmra.mxu0 %v2423
    %v2451 = vpop.f32.mrf.mxu0
    %v2452 = vadd.f32 %v2421, %v2451
    %2453 = vmatmul.f32.gmra.mxu0 %v2426
    %v2454 = vpop.f32.mrf.mxu0
    %v2455 = vadd.f32 %v2421, %v2454
    %2456 = vmatmul.f32.gmra.mxu0 %v2429
    %v2457 = vpop.f32.mrf.mxu0
    %v2458 = vadd.f32 %v2421, %v2457
    %2459 = vmatmul.f32.gmra.mxu0 %v2432
    %v2460 = vpop.f32.mrf.mxu0
    %v2461 = vadd.f32 %v2421, %v2460
    %2462 = vdwg.mxu0
    %2463 = vst.msk [vmem:[#allocation2] sm:$0xff] %vm194, %v2452
    %2464 = vst.msk [vmem:[#allocation2 + $0x8] sm:$0xff] %vm194, %v2455
    %2465 = vst.msk [vmem:[#allocation2 + $0x10] sm:$0xff] %vm194, %v2458
    %2466 = vst.msk [vmem:[#allocation2 + $0x18] sm:$0xff] %vm194, %v2461
    // Predicated region
    $region10: #{text_encoder_forward.1} parent=1 // pred_check
      _
    $region11: #{text_encoder_forward.1} parent=1 // pred_check_branch
      %2468 = sbr.rel (0) target = $region13
    $region12: #{text_encoder_forward.1} parent=1 // pred_region
      %2470 = vsyncadd [#allocation3], 0
      %s2471 = sshll.u32 [#allocation2], 4
      %s2472 = int_to_ptr.vmem [resolvable:$true] %s2471
      %s2473 = sshll.u32 %s2, 4
      %s2474 = int_to_ptr.hbm [resolvable:$true] %s2473
      %2479 = dma.vmem_to_hbm [thread:$0]  %s2472, 512, %s2474, [#allocation3], 128, 128, 8
    $region13: #{text_encoder_forward.1} parent=1 // pred_fallthru
      _
    // Predicated region
    $region14: #{text_encoder_forward.1} parent=1 // pred_check
      _
    $region15: #{text_encoder_forward.1} parent=1 // pred_check_branch
      %2481 = sbr.rel (0) target = $region17
    $region16: #{text_encoder_forward.1} parent=1 // pred_region
      %2483 = dma.done [#allocation3], 512
    $region17: #{text_encoder_forward.1} parent=1 // pred_fallthru
      _
    %2484 = vsyncpa [#allocation3], 1

</llo_original>
